<compile_context>
chip_gen: v6e
topology: v6e:2x2x1
jax: 0.10.0
libtpu: 0.0.40
codegen_flags: <defaults>
</compile_context>

<pallas_src>
import math
import functools

import jax
import jax.numpy as jnp
from jax import lax
from jax.experimental import pallas as pl
from jax.experimental.pallas import tpu as pltpu


def _mha_kernel(q_ref, k_ref, v_ref, vres_ref,
                wqT_ref, bq_ref, wkT_ref, bk_ref, wvT_ref, bv_ref,
                gamma_ref, beta_ref,
                out_ref, attn_ref,
                *, n_head, d_k, inv_scale, eps):
    # Block shapes:
    #   q_ref / vres_ref / out_ref : (1, tq, D)   query tile / residual tile
    #   k_ref / v_ref              : (1, S,  D)   full key/value sequence
    #   wqT/wkT/wvT                : (D, D)       pre-transposed weights
    #   bq/bk/bv/gamma/beta        : (1, D)
    #   attn_ref                   : (1, H, tq, S)
    q = q_ref[0]      # (tq, D)
    k = k_ref[0]      # (S, D)
    v = v_ref[0]      # (S, D)

    # Projections: pre-transposed weights -> straight MXU matmuls.
    # (k/v projections are grid-invariant along the q-tile axis and get
    #  recomputed per tile; cheap relative to the O(S^2) attention work.)
    qp = jnp.dot(q, wqT_ref[...], preferred_element_type=jnp.float32) + bq_ref[0]  # (tq, D)
    kp = jnp.dot(k, wkT_ref[...], preferred_element_type=jnp.float32) + bk_ref[0]  # (S, D)
    vp = jnp.dot(v, wvT_ref[...], preferred_element_type=jnp.float32) + bv_ref[0]  # (S, D)

    # Head split -> stacked (H, ., d_k) so attention is two batched einsums.
    H, dk = n_head, d_k
    qh = jnp.stack([qp[:, h * dk:(h + 1) * dk] for h in range(H)], axis=0)  # (H, tq, dk)
    kh = jnp.stack([kp[:, h * dk:(h + 1) * dk] for h in range(H)], axis=0)  # (H, S, dk)
    vh = jnp.stack([vp[:, h * dk:(h + 1) * dk] for h in range(H)], axis=0)  # (H, S, dk)

    # scores = (q_h @ k_h^T) / sqrt(d_k)   -> (H, tq, S)
    s = jnp.einsum('hqd,hkd->hqk', qh, kh,
                   preferred_element_type=jnp.float32) * inv_scale

    # numerically-stable softmax over the key axis (matches nn.Softmax)
    s = s - jnp.max(s, axis=-1, keepdims=True)
    e = jnp.exp(s)
    denom = jnp.sum(e, axis=-1, keepdims=True)
    attn = e * pl.reciprocal(denom)            # exact reciprocal (EUP) + VALU mul

    # Single lane-dense store of all heads' attention weights.
    attn_ref[0] = attn.astype(attn_ref.dtype)

    # context_h = attn @ v_h  -> (H, tq, dk); "unshape" to (tq, D)
    ctx_h = jnp.einsum('hqk,hkd->hqd', attn, vh,
                       preferred_element_type=jnp.float32)
    ctx = jnp.concatenate([ctx_h[h] for h in range(H)], axis=-1)   # (tq, D)

    # residual (raw v at the query positions) + LayerNorm(d_model),
    # eps=1e-6, biased variance (PyTorch semantics)
    res = ctx + vres_ref[0]
    mean = jnp.mean(res, axis=-1, keepdims=True)
    var = jnp.mean((res - mean) ** 2, axis=-1, keepdims=True)
    normed = (res - mean) * lax.rsqrt(var + eps)
    out_ref[0] = (normed * gamma_ref[0] + beta_ref[0]).astype(out_ref.dtype)


def multi_head_attention(q, k, v, params, *, n_head, block_q=None):
    """q, k, v: (B, S, D) float32.  Returns (norm_output (B,S,D), attns (B,H,S,S))."""
    B, S, D = q.shape
    assert D % n_head == 0
    d_k = D // n_head
    inv_scale = 1.0 / math.sqrt(d_k)

    wq, bq, wk, bk, wv, bv, gamma, beta = params
    # Pre-transpose once in the wrapper: kernel never runs an in-kernel .T
    wqT = jnp.asarray(wq.T)
    wkT = jnp.asarray(wk.T)
    wvT = jnp.asarray(wv.T)
    bq2 = bq.reshape(1, D)
    bk2 = bk.reshape(1, D)
    bv2 = bv.reshape(1, D)
    g2 = gamma.reshape(1, D)
    b2 = beta.reshape(1, D)

    # Query tiling: per-step VMEM for the attn block is H*tq*S*4 (double
    # buffered), linear in tq.  tq=128 keeps it modest at long S (v7x 64 MiB
    # budget); small inputs just use the full sequence as one tile.
    if block_q is not None:
        tq = block_q
    elif S % 128 == 0:
        tq = 128
    else:
        tq = S
    assert S % tq == 0
    n_q = S // tq

    kernel = functools.partial(_mha_kernel, n_head=n_head, d_k=d_k,
                               inv_scale=inv_scale, eps=1e-6)

    qtile_spec = pl.BlockSpec((1, tq, D), lambda b, i: (b, i, 0))
    full_spec = pl.BlockSpec((1, S, D), lambda b, i: (b, 0, 0))
    w_spec = pl.BlockSpec((D, D), lambda b, i: (0, 0))
    vec_spec = pl.BlockSpec((1, D), lambda b, i: (0, 0))

    out, attn = pl.pallas_call(
        kernel,
        out_shape=(
            jax.ShapeDtypeStruct((B, S, D), jnp.float32),
            jax.ShapeDtypeStruct((B, n_head, S, S), jnp.float32),
        ),
        grid_spec=pltpu.PrefetchScalarGridSpec(
            num_scalar_prefetch=0,
            grid=(B, n_q),
            in_specs=[
                qtile_spec,           # q (query tile)
                full_spec,            # k (full sequence)
                full_spec,            # v (full sequence, attention values)
                qtile_spec,           # v (query-tile slice, residual add)
                w_spec, vec_spec,     # Wq^T, bq
                w_spec, vec_spec,     # Wk^T, bk
                w_spec, vec_spec,     # Wv^T, bv
                vec_spec, vec_spec,   # gamma, beta
            ],
            out_specs=[
                pl.BlockSpec((1, tq, D), lambda b, i: (b, i, 0)),
                pl.BlockSpec((1, n_head, tq, S), lambda b, i: (b, 0, i, 0)),
            ],
        ),
        compiler_params=pltpu.CompilerParams(
            dimension_semantics=("parallel", "parallel"),
            vmem_limit_bytes=64 * 1024 * 1024,
        ),
    )(q, k, v, v, wqT, bq2, wkT, bk2, wvT, bv2, g2, b2)
    return out, attn


def _reference(q, k, v, params, *, n_head):
    """Pure-JAX reference of the PyTorch forward (eval mode)."""
    wq, bq, wk, bk, wv, bv, gamma, beta = params
    B, S, D = q.shape
    d_k = D // n_head

    def shape(x):
        return x.reshape(B, S, n_head, d_k).transpose(0, 2, 1, 3)

    query = shape(q @ wq.T + bq)
    key = shape(k @ wk.T + bk)
    value = shape(v @ wv.T + bv)
    scores = jnp.einsum('bhqd,bhkd->bhqk', query, key) / math.sqrt(d_k)
    attn = jax.nn.softmax(scores, axis=-1)
    ctx = jnp.einsum('bhqk,bhkd->bhqd', attn, value)
    ctx = ctx.transpose(0, 2, 1, 3).reshape(B, S, D)
    res = ctx + v
    mean = jnp.mean(res, axis=-1, keepdims=True)
    var = jnp.mean((res - mean) ** 2, axis=-1, keepdims=True)
    out = (res - mean) / jnp.sqrt(var + 1e-6) * gamma + beta
    return out, attn


if __name__ == "__main__":
    # small config: n_head=4, d_model=32, d_k=d_v=8, batch=2, seq=8
    n_head, d_model = 4, 32
    B, S = 2, 8

    key = jax.random.PRNGKey(0)
    ks = jax.random.split(key, 9)
    bound = 1.0 / math.sqrt(d_model)
    wq = jax.random.uniform(ks[0], (d_model, d_model), jnp.float32, -bound, bound)
    bq = jax.random.uniform(ks[1], (d_model,), jnp.float32, -bound, bound)
    wk = jax.random.uniform(ks[2], (d_model, d_model), jnp.float32, -bound, bound)
    bk = jax.random.uniform(ks[3], (d_model,), jnp.float32, -bound, bound)
    wv = jax.random.uniform(ks[4], (d_model, d_model), jnp.float32, -bound, bound)
    bv = jax.random.uniform(ks[5], (d_model,), jnp.float32, -bound, bound)
    gamma = jnp.ones((d_model,), jnp.float32)
    beta = jnp.zeros((d_model,), jnp.float32)
    params = (wq, bq, wk, bk, wv, bv, gamma, beta)

    q = jax.random.normal(ks[6], (B, S, d_model), jnp.float32)
    k = jax.random.normal(ks[7], (B, S, d_model), jnp.float32)
    v = jax.random.normal(ks[8], (B, S, d_model), jnp.float32)

    out, attn = multi_head_attention(q, k, v, params, n_head=n_head)
    jax.block_until_ready((out, attn))

    ref_out, ref_attn = _reference(q, k, v, params, n_head=n_head)
    assert jnp.allclose(out, ref_out, atol=1e-4, rtol=1e-4), "output mismatch"
    assert jnp.allclose(attn, ref_attn, atol=1e-5, rtol=1e-5), "attn mismatch"

    print("KERNEL_OK")
</pallas_src>

<mosaic_0001>
module attributes {stable_mosaic.version = 11 : i64} {
  func.func @_mha_kernel(%arg0: i32, %arg1: i32, %arg2: memref<1x8x32xf32, #tpu.memory_space<vmem>>, %arg3: memref<1x8x32xf32, #tpu.memory_space<vmem>>, %arg4: memref<1x8x32xf32, #tpu.memory_space<vmem>>, %arg5: memref<1x8x32xf32, #tpu.memory_space<vmem>>, %arg6: memref<32x32xf32, #tpu.memory_space<vmem>>, %arg7: memref<1x32xf32, #tpu.memory_space<vmem>>, %arg8: memref<32x32xf32, #tpu.memory_space<vmem>>, %arg9: memref<1x32xf32, #tpu.memory_space<vmem>>, %arg10: memref<32x32xf32, #tpu.memory_space<vmem>>, %arg11: memref<1x32xf32, #tpu.memory_space<vmem>>, %arg12: memref<1x32xf32, #tpu.memory_space<vmem>>, %arg13: memref<1x32xf32, #tpu.memory_space<vmem>>, %arg14: memref<1x8x32xf32, #tpu.memory_space<vmem>>, %arg15: memref<1x4x8x8xf32, #tpu.memory_space<vmem>>) attributes {dimension_semantics = [#tpu.dimension_semantics<parallel>, #tpu.dimension_semantics<parallel>], iteration_bounds = array<i64: 2, 1>, scalar_prefetch = 0 : i64, scratch_operands = 0 : i64, tpu.core_type = #tpu.core_type<tc>, window_params = [{transform_indices = @transform_0, window_bounds = array<i64: 1, 8, 32>}, {transform_indices = @transform_1, window_bounds = array<i64: 1, 8, 32>}, {transform_indices = @transform_2, window_bounds = array<i64: 1, 8, 32>}, {transform_indices = @transform_3, window_bounds = array<i64: 1, 8, 32>}, {pipeline_mode = #tpu.pipeline_mode<synchronous>, transform_indices = @transform_4, window_bounds = array<i64: 32, 32>}, {pipeline_mode = #tpu.pipeline_mode<synchronous>, transform_indices = @transform_5, window_bounds = array<i64: 1, 32>}, {pipeline_mode = #tpu.pipeline_mode<synchronous>, transform_indices = @transform_6, window_bounds = array<i64: 32, 32>}, {pipeline_mode = #tpu.pipeline_mode<synchronous>, transform_indices = @transform_7, window_bounds = array<i64: 1, 32>}, {pipeline_mode = #tpu.pipeline_mode<synchronous>, transform_indices = @transform_8, window_bounds = array<i64: 32, 32>}, {pipeline_mode = #tpu.pipeline_mode<synchronous>, transform_indices = @transform_9, window_bounds = array<i64: 1, 32>}, {pipeline_mode = #tpu.pipeline_mode<synchronous>, transform_indices = @transform_10, window_bounds = array<i64: 1, 32>}, {pipeline_mode = #tpu.pipeline_mode<synchronous>, transform_indices = @transform_11, window_bounds = array<i64: 1, 32>}, {transform_indices = @transform_12, window_bounds = array<i64: 1, 8, 32>}, {transform_indices = @transform_13, window_bounds = array<i64: 1, 4, 8, 8>}]} {
    %c0 = arith.constant 0 : index
    %c0_0 = arith.constant 0 : index
    %c0_1 = arith.constant 0 : index
    %0 = vector.load %arg2[%c0, %c0_0, %c0_1] : memref<1x8x32xf32, #tpu.memory_space<vmem>>, vector<1x8x32xf32>
    %1 = vector.shape_cast %0 : vector<1x8x32xf32> to vector<8x32xf32>
    %c0_2 = arith.constant 0 : index
    %c0_3 = arith.constant 0 : index
    %c0_4 = arith.constant 0 : index
    %2 = vector.load %arg3[%c0_2, %c0_3, %c0_4] : memref<1x8x32xf32, #tpu.memory_space<vmem>>, vector<1x8x32xf32>
    %3 = vector.shape_cast %2 : vector<1x8x32xf32> to vector<8x32xf32>
    %c0_5 = arith.constant 0 : index
    %c0_6 = arith.constant 0 : index
    %c0_7 = arith.constant 0 : index
    %4 = vector.load %arg4[%c0_5, %c0_6, %c0_7] : memref<1x8x32xf32, #tpu.memory_space<vmem>>, vector<1x8x32xf32>
    %5 = vector.shape_cast %4 : vector<1x8x32xf32> to vector<8x32xf32>
    %c0_8 = arith.constant 0 : index
    %c0_9 = arith.constant 0 : index
    %6 = vector.load %arg6[%c0_8, %c0_9] : memref<32x32xf32, #tpu.memory_space<vmem>>, vector<32x32xf32>
    %cst = arith.constant dense<0.000000e+00> : vector<8x32xf32>
    %7 = tpu.matmul %1, %6, %cst {dimension_numbers = #tpu.dot_dimension_numbers<[1], [0], [0], [1], [0, 0, 1, 1], [], []>} : vector<8x32xf32>, vector<32x32xf32>, vector<8x32xf32> -> vector<8x32xf32>
    %c0_10 = arith.constant 0 : index
    %c0_11 = arith.constant 0 : index
    %8 = vector.load %arg7[%c0_10, %c0_11] : memref<1x32xf32, #tpu.memory_space<vmem>>, vector<1x32xf32>
    %9 = vector.shape_cast %8 : vector<1x32xf32> to vector<32xf32>
    %10 = vector.shape_cast %9 : vector<32xf32> to vector<1x32xf32>
    %11 = vector.broadcast %10 : vector<1x32xf32> to vector<8x32xf32>
    %12 = arith.addf %7, %11 : vector<8x32xf32>
    %c0_12 = arith.constant 0 : index
    %c0_13 = arith.constant 0 : index
    %13 = vector.load %arg8[%c0_12, %c0_13] : memref<32x32xf32, #tpu.memory_space<vmem>>, vector<32x32xf32>
    %cst_14 = arith.constant dense<0.000000e+00> : vector<8x32xf32>
    %14 = tpu.matmul %3, %13, %cst_14 {dimension_numbers = #tpu.dot_dimension_numbers<[1], [0], [0], [1], [0, 0, 1, 1], [], []>} : vector<8x32xf32>, vector<32x32xf32>, vector<8x32xf32> -> vector<8x32xf32>
    %c0_15 = arith.constant 0 : index
    %c0_16 = arith.constant 0 : index
    %15 = vector.load %arg9[%c0_15, %c0_16] : memref<1x32xf32, #tpu.memory_space<vmem>>, vector<1x32xf32>
    %16 = vector.shape_cast %15 : vector<1x32xf32> to vector<32xf32>
    %17 = vector.shape_cast %16 : vector<32xf32> to vector<1x32xf32>
    %18 = vector.broadcast %17 : vector<1x32xf32> to vector<8x32xf32>
    %19 = arith.addf %14, %18 : vector<8x32xf32>
    %c0_17 = arith.constant 0 : index
    %c0_18 = arith.constant 0 : index
    %20 = vector.load %arg10[%c0_17, %c0_18] : memref<32x32xf32, #tpu.memory_space<vmem>>, vector<32x32xf32>
    %cst_19 = arith.constant dense<0.000000e+00> : vector<8x32xf32>
    %21 = tpu.matmul %5, %20, %cst_19 {dimension_numbers = #tpu.dot_dimension_numbers<[1], [0], [0], [1], [0, 0, 1, 1], [], []>} : vector<8x32xf32>, vector<32x32xf32>, vector<8x32xf32> -> vector<8x32xf32>
    %c0_20 = arith.constant 0 : index
    %c0_21 = arith.constant 0 : index
    %22 = vector.load %arg11[%c0_20, %c0_21] : memref<1x32xf32, #tpu.memory_space<vmem>>, vector<1x32xf32>
    %23 = vector.shape_cast %22 : vector<1x32xf32> to vector<32xf32>
    %24 = vector.shape_cast %23 : vector<32xf32> to vector<1x32xf32>
    %25 = vector.broadcast %24 : vector<1x32xf32> to vector<8x32xf32>
    %26 = arith.addf %21, %25 : vector<8x32xf32>
    %27 = vector.extract_strided_slice %12 {offsets = [0, 0], sizes = [8, 8], strides = [1, 1]} : vector<8x32xf32> to vector<8x8xf32>
    %28 = vector.extract_strided_slice %12 {offsets = [0, 8], sizes = [8, 8], strides = [1, 1]} : vector<8x32xf32> to vector<8x8xf32>
    %29 = vector.extract_strided_slice %12 {offsets = [0, 16], sizes = [8, 8], strides = [1, 1]} : vector<8x32xf32> to vector<8x8xf32>
    %30 = vector.extract_strided_slice %12 {offsets = [0, 24], sizes = [8, 8], strides = [1, 1]} : vector<8x32xf32> to vector<8x8xf32>
    %31 = vector.shape_cast %27 : vector<8x8xf32> to vector<1x8x8xf32>
    %32 = vector.shape_cast %28 : vector<8x8xf32> to vector<1x8x8xf32>
    %33 = vector.shape_cast %29 : vector<8x8xf32> to vector<1x8x8xf32>
    %34 = vector.shape_cast %30 : vector<8x8xf32> to vector<1x8x8xf32>
    %35 = tpu.concatenate %31, %32, %33, %34 in 0 : vector<1x8x8xf32>, vector<1x8x8xf32>, vector<1x8x8xf32>, vector<1x8x8xf32> -> vector<4x8x8xf32>
    %36 = vector.extract_strided_slice %19 {offsets = [0, 0], sizes = [8, 8], strides = [1, 1]} : vector<8x32xf32> to vector<8x8xf32>
    %37 = vector.extract_strided_slice %19 {offsets = [0, 8], sizes = [8, 8], strides = [1, 1]} : vector<8x32xf32> to vector<8x8xf32>
    %38 = vector.extract_strided_slice %19 {offsets = [0, 16], sizes = [8, 8], strides = [1, 1]} : vector<8x32xf32> to vector<8x8xf32>
    %39 = vector.extract_strided_slice %19 {offsets = [0, 24], sizes = [8, 8], strides = [1, 1]} : vector<8x32xf32> to vector<8x8xf32>
    %40 = vector.shape_cast %36 : vector<8x8xf32> to vector<1x8x8xf32>
    %41 = vector.shape_cast %37 : vector<8x8xf32> to vector<1x8x8xf32>
    %42 = vector.shape_cast %38 : vector<8x8xf32> to vector<1x8x8xf32>
    %43 = vector.shape_cast %39 : vector<8x8xf32> to vector<1x8x8xf32>
    %44 = tpu.concatenate %40, %41, %42, %43 in 0 : vector<1x8x8xf32>, vector<1x8x8xf32>, vector<1x8x8xf32>, vector<1x8x8xf32> -> vector<4x8x8xf32>
    %45 = vector.extract_strided_slice %26 {offsets = [0, 0], sizes = [8, 8], strides = [1, 1]} : vector<8x32xf32> to vector<8x8xf32>
    %46 = vector.extract_strided_slice %26 {offsets = [0, 8], sizes = [8, 8], strides = [1, 1]} : vector<8x32xf32> to vector<8x8xf32>
    %47 = vector.extract_strided_slice %26 {offsets = [0, 16], sizes = [8, 8], strides = [1, 1]} : vector<8x32xf32> to vector<8x8xf32>
    %48 = vector.extract_strided_slice %26 {offsets = [0, 24], sizes = [8, 8], strides = [1, 1]} : vector<8x32xf32> to vector<8x8xf32>
    %49 = vector.shape_cast %45 : vector<8x8xf32> to vector<1x8x8xf32>
    %50 = vector.shape_cast %46 : vector<8x8xf32> to vector<1x8x8xf32>
    %51 = vector.shape_cast %47 : vector<8x8xf32> to vector<1x8x8xf32>
    %52 = vector.shape_cast %48 : vector<8x8xf32> to vector<1x8x8xf32>
    %53 = tpu.concatenate %49, %50, %51, %52 in 0 : vector<1x8x8xf32>, vector<1x8x8xf32>, vector<1x8x8xf32>, vector<1x8x8xf32> -> vector<4x8x8xf32>
    "tpu.trace_start"() <{level = 10 : i32, message = "hqd,hkd->hqk"}> : () -> ()
    %cst_22 = arith.constant dense<0.000000e+00> : vector<4x8x8xf32>
    %54 = tpu.matmul %35, %44, %cst_22 {dimension_numbers = #tpu.dot_dimension_numbers<[2], [2], [1], [1], [0, 0, 0, 1, 1, 1], [0], [0]>} : vector<4x8x8xf32>, vector<4x8x8xf32>, vector<4x8x8xf32> -> vector<4x8x8xf32>
    "tpu.trace_stop"() : () -> ()
    %cst_23 = arith.constant 0.353553385 : f32
    %55 = vector.broadcast %cst_23 : f32 to vector<4x8x8xf32>
    %56 = arith.mulf %54, %55 : vector<4x8x8xf32>
    %cst_24 = arith.constant dense<0xFF800000> : vector<4x8xf32>
    %57 = vector.multi_reduction <maximumf>, %56, %cst_24 [2] : vector<4x8x8xf32> to vector<4x8xf32>
    %58 = vector.shape_cast %57 : vector<4x8xf32> to vector<4x8x1xf32>
    %59 = vector.broadcast %58 : vector<4x8x1xf32> to vector<4x8x8xf32>
    %60 = arith.subf %56, %59 : vector<4x8x8xf32>
    %61 = math.exp %60 : vector<4x8x8xf32>
    %cst_25 = arith.constant dense<0.000000e+00> : vector<4x8xf32>
    %62 = vector.multi_reduction <add>, %61, %cst_25 [2] : vector<4x8x8xf32> to vector<4x8xf32>
    %63 = vector.shape_cast %62 : vector<4x8xf32> to vector<4x8x1xf32>
    %64 = tpu.reciprocal %63 : vector<4x8x1xf32> -> vector<4x8x1xf32>
    %65 = vector.broadcast %64 : vector<4x8x1xf32> to vector<4x8x8xf32>
    %66 = arith.mulf %61, %65 : vector<4x8x8xf32>
    %c0_26 = arith.constant 0 : index
    %c0_27 = arith.constant 0 : index
    %c0_28 = arith.constant 0 : index
    %c0_29 = arith.constant 0 : index
    %67 = vector.load %arg15[%c0_26, %c0_27, %c0_28, %c0_29] : memref<1x4x8x8xf32, #tpu.memory_space<vmem>>, vector<1x4x8x8xf32>
    %68 = vector.shape_cast %67 : vector<1x4x8x8xf32> to vector<4x8x8xf32>
    %69 = vector.shape_cast %66 : vector<4x8x8xf32> to vector<1x4x8x8xf32>
    tpu.vector_store %arg15[%c0_26, %c0_27, %c0_28, %c0_29], %69 {strides = array<i32>} : memref<1x4x8x8xf32, #tpu.memory_space<vmem>>, vector<1x4x8x8xf32>,
    "tpu.trace_start"() <{level = 10 : i32, message = "hqk,hkd->hqd"}> : () -> ()
    %cst_30 = arith.constant dense<0.000000e+00> : vector<4x8x8xf32>
    %70 = tpu.matmul %66, %53, %cst_30 {dimension_numbers = #tpu.dot_dimension_numbers<[2], [1], [1], [2], [0, 0, 0, 1, 1, 2], [0], [0]>} : vector<4x8x8xf32>, vector<4x8x8xf32>, vector<4x8x8xf32> -> vector<4x8x8xf32>
    "tpu.trace_stop"() : () -> ()
    %71 = vector.extract_strided_slice %70 {offsets = [0, 0, 0], sizes = [1, 8, 8], strides = [1, 1, 1]} : vector<4x8x8xf32> to vector<1x8x8xf32>
    %72 = vector.shape_cast %71 : vector<1x8x8xf32> to vector<8x8xf32>
    %73 = vector.extract_strided_slice %70 {offsets = [1, 0, 0], sizes = [1, 8, 8], strides = [1, 1, 1]} : vector<4x8x8xf32> to vector<1x8x8xf32>
    %74 = vector.shape_cast %73 : vector<1x8x8xf32> to vector<8x8xf32>
    %75 = vector.extract_strided_slice %70 {offsets = [2, 0, 0], sizes = [1, 8, 8], strides = [1, 1, 1]} : vector<4x8x8xf32> to vector<1x8x8xf32>
    %76 = vector.shape_cast %75 : vector<1x8x8xf32> to vector<8x8xf32>
    %77 = vector.extract_strided_slice %70 {offsets = [3, 0, 0], sizes = [1, 8, 8], strides = [1, 1, 1]} : vector<4x8x8xf32> to vector<1x8x8xf32>
    %78 = vector.shape_cast %77 : vector<1x8x8xf32> to vector<8x8xf32>
    %79 = tpu.concatenate %72, %74, %76, %78 in 1 : vector<8x8xf32>, vector<8x8xf32>, vector<8x8xf32>, vector<8x8xf32> -> vector<8x32xf32>
    %c0_31 = arith.constant 0 : index
    %c0_32 = arith.constant 0 : index
    %c0_33 = arith.constant 0 : index
    %80 = vector.load %arg5[%c0_31, %c0_32, %c0_33] : memref<1x8x32xf32, #tpu.memory_space<vmem>>, vector<1x8x32xf32>
    %81 = vector.shape_cast %80 : vector<1x8x32xf32> to vector<8x32xf32>
    %82 = arith.addf %79, %81 : vector<8x32xf32>
    %cst_34 = arith.constant dense<0.000000e+00> : vector<8xf32>
    %83 = vector.multi_reduction <add>, %82, %cst_34 [1] : vector<8x32xf32> to vector<8xf32>
    %84 = vector.shape_cast %83 : vector<8xf32> to vector<8x1xf32>
    %cst_35 = arith.constant 3.200000e+01 : f32
    %85 = vector.broadcast %cst_35 : f32 to vector<8x1xf32>
    %86 = arith.divf %84, %85 : vector<8x1xf32>
    %87 = vector.broadcast %86 : vector<8x1xf32> to vector<8x32xf32>
    %88 = arith.subf %82, %87 : vector<8x32xf32>
    %89 = arith.mulf %88, %88 : vector<8x32xf32>
    %cst_36 = arith.constant dense<0.000000e+00> : vector<8xf32>
    %90 = vector.multi_reduction <add>, %89, %cst_36 [1] : vector<8x32xf32> to vector<8xf32>
    %91 = vector.shape_cast %90 : vector<8xf32> to vector<8x1xf32>
    %cst_37 = arith.constant 3.200000e+01 : f32
    %92 = vector.broadcast %cst_37 : f32 to vector<8x1xf32>
    %93 = arith.divf %91, %92 : vector<8x1xf32>
    %94 = vector.broadcast %86 : vector<8x1xf32> to vector<8x32xf32>
    %95 = arith.subf %82, %94 : vector<8x32xf32>
    %cst_38 = arith.constant 9.99999997E-7 : f32
    %96 = vector.broadcast %cst_38 : f32 to vector<8x1xf32>
    %97 = arith.addf %93, %96 : vector<8x1xf32>
    %98 = math.rsqrt %97 : vector<8x1xf32>
    %99 = vector.broadcast %98 : vector<8x1xf32> to vector<8x32xf32>
    %100 = arith.mulf %95, %99 : vector<8x32xf32>
    %c0_39 = arith.constant 0 : index
    %c0_40 = arith.constant 0 : index
    %101 = vector.load %arg12[%c0_39, %c0_40] : memref<1x32xf32, #tpu.memory_space<vmem>>, vector<1x32xf32>
    %102 = vector.shape_cast %101 : vector<1x32xf32> to vector<32xf32>
    %103 = vector.shape_cast %102 : vector<32xf32> to vector<1x32xf32>
    %104 = vector.broadcast %103 : vector<1x32xf32> to vector<8x32xf32>
    %105 = arith.mulf %100, %104 : vector<8x32xf32>
    %c0_41 = arith.constant 0 : index
    %c0_42 = arith.constant 0 : index
    %106 = vector.load %arg13[%c0_41, %c0_42] : memref<1x32xf32, #tpu.memory_space<vmem>>, vector<1x32xf32>
    %107 = vector.shape_cast %106 : vector<1x32xf32> to vector<32xf32>
    %108 = vector.shape_cast %107 : vector<32xf32> to vector<1x32xf32>
    %109 = vector.broadcast %108 : vector<1x32xf32> to vector<8x32xf32>
    %110 = arith.addf %105, %109 : vector<8x32xf32>
    %c0_43 = arith.constant 0 : index
    %c0_44 = arith.constant 0 : index
    %c0_45 = arith.constant 0 : index
    %111 = vector.load %arg14[%c0_43, %c0_44, %c0_45] : memref<1x8x32xf32, #tpu.memory_space<vmem>>, vector<1x8x32xf32>
    %112 = vector.shape_cast %111 : vector<1x8x32xf32> to vector<8x32xf32>
    %113 = vector.shape_cast %110 : vector<8x32xf32> to vector<1x8x32xf32>
    tpu.vector_store %arg14[%c0_43, %c0_44, %c0_45], %113 {strides = array<i32>} : memref<1x8x32xf32, #tpu.memory_space<vmem>>, vector<1x8x32xf32>,
    return
  }
  func.func @transform_0(%arg0: i32, %arg1: i32) -> (i32, i32, i32) {
    %c0_i32 = arith.constant 0 : i32
    %c0_i32_0 = arith.constant 0 : i32
    return %arg0, %arg1, %c0_i32 : i32, i32, i32
  }
  func.func @transform_1(%arg0: i32, %arg1: i32) -> (i32, i32, i32) {
    %c0_i32 = arith.constant 0 : i32
    %c0_i32_0 = arith.constant 0 : i32
    %c0_i32_1 = arith.constant 0 : i32
    return %arg0, %c0_i32, %c0_i32_0 : i32, i32, i32
  }
  func.func @transform_2(%arg0: i32, %arg1: i32) -> (i32, i32, i32) {
    %c0_i32 = arith.constant 0 : i32
    %c0_i32_0 = arith.constant 0 : i32
    %c0_i32_1 = arith.constant 0 : i32
    return %arg0, %c0_i32, %c0_i32_0 : i32, i32, i32
  }
  func.func @transform_3(%arg0: i32, %arg1: i32) -> (i32, i32, i32) {
    %c0_i32 = arith.constant 0 : i32
    %c0_i32_0 = arith.constant 0 : i32
    return %arg0, %arg1, %c0_i32 : i32, i32, i32
  }
  func.func @transform_4(%arg0: i32, %arg1: i32) -> (i32, i32) {
    %c0_i32 = arith.constant 0 : i32
    %c0_i32_0 = arith.constant 0 : i32
    %c0_i32_1 = arith.constant 0 : i32
    return %c0_i32, %c0_i32_0 : i32, i32
  }
  func.func @transform_5(%arg0: i32, %arg1: i32) -> (i32, i32) {
    %c0_i32 = arith.constant 0 : i32
    %c0_i32_0 = arith.constant 0 : i32
    %c0_i32_1 = arith.constant 0 : i32
    return %c0_i32, %c0_i32_0 : i32, i32
  }
  func.func @transform_6(%arg0: i32, %arg1: i32) -> (i32, i32) {
    %c0_i32 = arith.constant 0 : i32
    %c0_i32_0 = arith.constant 0 : i32
    %c0_i32_1 = arith.constant 0 : i32
    return %c0_i32, %c0_i32_0 : i32, i32
  }
  func.func @transform_7(%arg0: i32, %arg1: i32) -> (i32, i32) {
    %c0_i32 = arith.constant 0 : i32
    %c0_i32_0 = arith.constant 0 : i32
    %c0_i32_1 = arith.constant 0 : i32
    return %c0_i32, %c0_i32_0 : i32, i32
  }
  func.func @transform_8(%arg0: i32, %arg1: i32) -> (i32, i32) {
    %c0_i32 = arith.constant 0 : i32
    %c0_i32_0 = arith.constant 0 : i32
    %c0_i32_1 = arith.constant 0 : i32
    return %c0_i32, %c0_i32_0 : i32, i32
  }
  func.func @transform_9(%arg0: i32, %arg1: i32) -> (i32, i32) {
    %c0_i32 = arith.constant 0 : i32
    %c0_i32_0 = arith.constant 0 : i32
    %c0_i32_1 = arith.constant 0 : i32
    return %c0_i32, %c0_i32_0 : i32, i32
  }
  func.func @transform_10(%arg0: i32, %arg1: i32) -> (i32, i32) {
    %c0_i32 = arith.constant 0 : i32
    %c0_i32_0 = arith.constant 0 : i32
    %c0_i32_1 = arith.constant 0 : i32
    return %c0_i32, %c0_i32_0 : i32, i32
  }
  func.func @transform_11(%arg0: i32, %arg1: i32) -> (i32, i32) {
    %c0_i32 = arith.constant 0 : i32
    %c0_i32_0 = arith.constant 0 : i32
    %c0_i32_1 = arith.constant 0 : i32
    return %c0_i32, %c0_i32_0 : i32, i32
  }
  func.func @transform_12(%arg0: i32, %arg1: i32) -> (i32, i32, i32) {
    %c0_i32 = arith.constant 0 : i32
    %c0_i32_0 = arith.constant 0 : i32
    return %arg0, %arg1, %c0_i32 : i32, i32, i32
  }
  func.func @transform_13(%arg0: i32, %arg1: i32) -> (i32, i32, i32, i32) {
    %c0_i32 = arith.constant 0 : i32
    %c0_i32_0 = arith.constant 0 : i32
    %c0_i32_1 = arith.constant 0 : i32
    return %arg0, %c0_i32, %arg1, %c0_i32_0 : i32, i32, i32, i32
  }
}

</mosaic_0001>

<llo_original>
// kernel: tpu_custom_call.1
$region0: #{tpu_custom_call.1}
  #allocation0 [shape = 'u32[]', space=smem, size = 0x4, offset = 0x4, fixed_abs, tag = 'smem constant byte address 0x4 - core index']
  #allocation1 [shape = 'u32[144,128]{1,0:T(1,128)}', space=vmem, size = 0x12000, scoped, tag = 'internal scratch']
  %s0 = inlined_call_operand.hbm [shape: f32[2,8,32], index: 0, kind: input, shape index: {}]
  %s1 = inlined_call_operand.hbm [shape: f32[2,8,32], index: 1, kind: input, shape index: {}]
  %s2 = inlined_call_operand.hbm [shape: f32[2,8,32], index: 2, kind: input, shape index: {}]
  %s3 = inlined_call_operand.hbm [shape: f32[2,8,32], index: 3, kind: input, shape index: {}]
  %s4 = inlined_call_operand.hbm [shape: f32[32,32], index: 4, kind: input, shape index: {}]
  %s5 = inlined_call_operand.vmem [shape: f32[1,32], index: 5, kind: input, shape index: {}]
  %s6 = inlined_call_operand.hbm [shape: f32[32,32], index: 6, kind: input, shape index: {}]
  %s7 = inlined_call_operand.vmem [shape: f32[1,32], index: 7, kind: input, shape index: {}]
  %s8 = inlined_call_operand.hbm [shape: f32[32,32], index: 8, kind: input, shape index: {}]
  %s9 = inlined_call_operand.vmem [shape: f32[1,32], index: 9, kind: input, shape index: {}]
  %s10 = inlined_call_operand.vmem [shape: f32[1,32], index: 10, kind: input, shape index: {}]
  %s11 = inlined_call_operand.vmem [shape: f32[1,32], index: 11, kind: input, shape index: {}]
  %s12 = inlined_call_operand.hbm [shape: f32[2,8,32], index: 12, kind: output, shape index: {0}]
  %s13 = inlined_call_operand.hbm [shape: f32[2,4,8,8], index: 13, kind: output, shape index: {1}]
  %14 = xla_tuple %s12, %s13
  %s15 = sld [smem:[#allocation0]]
  $region117: #{tpu_custom_call.1} parent=0
    _
  %s17 = ssub.s32 1, %s15
  %s18 = scalar_select 0, %s17, %s15
  $region1: #{tpu_custom_call.1} parent=0
    #allocation2 [shape = 'u8[8192]{0}', space=vmem, size = 0x2000, scoped, tag = 'input window, operand 0']
    #allocation3 [shape = 's32[2]{0}', space=sflag, size = 0x8, scoped, tag = 'scoped memory for tpu_custom_call.1']
    #allocation4 [shape = 's32[2]{0}', space=sflag, size = 0x8, scoped, tag = 'scoped memory for tpu_custom_call.1']
    #allocation5 [shape = 'u8[8192]{0}', space=vmem, size = 0x2000, scoped, tag = 'input window, operand 1']
    #allocation6 [shape = 's32[2]{0}', space=sflag, size = 0x8, scoped, tag = 'scoped memory for tpu_custom_call.1']
    #allocation7 [shape = 'u8[8192]{0}', space=vmem, size = 0x2000, scoped, tag = 'input window, operand 2']
    #allocation8 [shape = 'u8[8192]{0}', space=vmem, size = 0x2000, scoped, tag = 'input window, operand 3']
    #allocation9 [shape = 's32[2]{0}', space=sflag, size = 0x8, scoped, tag = 'scoped memory for tpu_custom_call.1']
    #allocation10 [shape = 'u8[16384]{0}', space=vmem, size = 0x4000, scoped, tag = 'input window, operand 4, single buffered']
    #allocation11 [shape = 'u8[16384]{0}', space=vmem, size = 0x4000, scoped, tag = 'input window, operand 6, single buffered']
    #allocation12 [shape = 's32[1]{0}', space=sflag, size = 0x4, scoped, tag = 'scoped memory for tpu_custom_call.1']
    #allocation13 [shape = 'u8[16384]{0}', space=vmem, size = 0x4000, scoped, tag = 'input window, operand 8, single buffered']
    #allocation14 [shape = 'u8[8192]{0}', space=vmem, size = 0x2000, scoped, tag = 'output window, operand 0']
    #allocation15 [shape = 'u8[32768]{0}', space=vmem, size = 0x8000, scoped, tag = 'output window, operand 1']
    #allocation16 [shape = 's32[2]{0}', space=sflag, size = 0x8, scoped, tag = 'scoped memory for tpu_custom_call.1']
    %19 = vsyncpa [#allocation3], 0
    %s20 = scalar_lea.sflag [#allocation3], 1
    %21 = vsyncpa %s20, 0
    %22 = vsyncpa [#allocation6], 0
    %s23 = scalar_lea.sflag [#allocation6], 1
    %24 = vsyncpa %s23, 0
    %25 = vsyncpa [#allocation9], 0
    %s26 = scalar_lea.sflag [#allocation9], 1
    %27 = vsyncpa %s26, 0
    %28 = vsyncpa [#allocation12], 0
    %29 = vsyncpa [#allocation4], 0
    %s30 = scalar_lea.sflag [#allocation4], 1
    %31 = vsyncpa %s30, 0
    %32 = vsyncpa [#allocation16], 0
    %s33 = scalar_lea.sflag [#allocation16], 1
    %34 = vsyncpa %s33, 0
    loop: start=0, step=1, limit=4
    $region2: #{tpu_custom_call.1} parent=1 // loop_pre_header
      _
    $region3: #{tpu_custom_call.1} parent=1 // loop_header
      %s36 = sphi 0, %s40
      %p37 = scmp.ge.s32.totalorder %s36, 4
      %s43 = sphi 0, %s55
      %s44 = sphi 0, %s51
      %s45 = sphi 0, %s43
      %s46 = sphi 0, %s44
      %s47 = sphi 0, %s45
      %s48 = sphi 0, %s46
      %s60 = sphi 0, %s62
      %s63 = sphi 0, %s60
      %s64 = sphi 0, %s63
      %s80 = sphi 0, %s64
      %s86 = sphi 0, %s88
      %s89 = sphi 0, %s86
      %s90 = sphi 0, %s89
      %s106 = sphi 0, %s90
      %s112 = sphi 0, %s114
      %s115 = sphi 0, %s112
      %s116 = sphi 0, %s115
      %s132 = sphi 0, %s116
      %s140 = sphi 0, %s142
      %s143 = sphi 0, %s140
      %s144 = sphi 0, %s143
      %s160 = sphi 0, %s144
      %s164 = sphi 0, %s164
      %s166 = sphi 0, %s164
      %s167 = sphi 0, %s166
      %s181 = sphi 0, %s167
      %s185 = sphi 0, %s185
      %s187 = sphi 0, %s185
      %s188 = sphi 0, %s187
      %s202 = sphi 0, %s188
      %s206 = sphi 0, %s206
      %s208 = sphi 0, %s206
      %s209 = sphi 0, %s208
      %s223 = sphi 0, %s209
      %s227 = sphi 0, %s227
      %s229 = sphi 0, %s227
      %s230 = sphi 0, %s229
      %s244 = sphi 0, %s230
      %s248 = sphi 0, %s248
      %s250 = sphi 0, %s248
      %s251 = sphi 0, %s250
      %s265 = sphi 0, %s251
      %s269 = sphi 0, %s269
      %s271 = sphi 0, %s269
      %s272 = sphi 0, %s271
      %s286 = sphi 0, %s272
      %s290 = sphi 0, %s290
      %s292 = sphi 0, %s290
      %s293 = sphi 0, %s292
      %s307 = sphi 0, %s293
      %s311 = sphi 0, %s311
      %s313 = sphi 0, %s311
      %s314 = sphi 0, %s313
      %s328 = sphi 0, %s314
      %s336 = sphi 0, %s338
      %s339 = sphi 0, %s336
      %s340 = sphi 0, %s339
      %s356 = sphi 0, %s340
      %s364 = sphi 0, %s366
      %s367 = sphi 0, %s364
      %s368 = sphi 0, %s367
      %s384 = sphi 0, %s368
    $region4: #{tpu_custom_call.1} parent=1 // loop_header_branch
      %39 = sbr.rel (%p37) target = $region8
    $region5: #{tpu_custom_call.1} parent=1 // loop_body
      %s41 = ssub.s32 %s36, 1
      %s42 = ssub.s32 %s36, 2
      %s49 = sadd.s32 1, %s44
      %p50 = scmp.ge.s32.totalorder %s49, 1
      %s51 = scalar_select %p50, 0, %s49
      %s52 = sadd.s32 1, %s43
      %s53 = scalar_select %p50, %s52, %s43
      %p54 = scmp.ge.s32.totalorder %s53, 2
      %s55 = scalar_select %p54, 0, %s53
      %s56 = ssub.s32 %s43, %s55
      %s57 = ssub.s32 %s44, %s51
      %s58 = sor.u32 %s56, %s57
      %p59 = scmp.eq.s32.totalorder %s58, 0
      %s61 = sadd.s32 %s60, 1
      %s62 = scalar_select %p59, %s60, %s61
      %p65 = pneg %p59
      %p66 = scmp.eq.s32.totalorder %s36, 1
      %p67 = por %p65, %p66
      %p68 = scmp.ne.s32.totalorder %s60, %s63
      %p69 = scmp.eq.s32.totalorder %s36, 0
      %p70 = por %p68, %p69
      %p71 = scmp.ne.s32.totalorder %s60, %s63
      %p72 = scmp.eq.s32.totalorder %s41, 1
      %p73 = por %p71, %p72
      %p74 = scmp.ne.s32.totalorder %s63, %s64
      %p75 = scmp.eq.s32.totalorder %s41, 0
      %p76 = por %p74, %p75
      %p77 = scmp.ne.s32.totalorder %s63, %s64
      %p78 = scmp.eq.s32.totalorder %s42, 1
      %p79 = por %p77, %p78
      %p81 = scmp.ne.s32.totalorder %s64, %s80
      %p82 = scmp.eq.s32.totalorder %s42, 0
      %p83 = por %p81, %p82
      %s84 = ssub.s32 %s43, %s55
      %p85 = scmp.eq.s32.totalorder %s84, 0
      %s87 = sadd.s32 %s86, 1
      %s88 = scalar_select %p85, %s86, %s87
      %p91 = pneg %p85
      %p92 = scmp.eq.s32.totalorder %s36, 1
      %p93 = por %p91, %p92
      %p94 = scmp.ne.s32.totalorder %s86, %s89
      %p95 = scmp.eq.s32.totalorder %s36, 0
      %p96 = por %p94, %p95
      %p97 = scmp.ne.s32.totalorder %s86, %s89
      %p98 = scmp.eq.s32.totalorder %s41, 1
      %p99 = por %p97, %p98
      %p100 = scmp.ne.s32.totalorder %s89, %s90
      %p101 = scmp.eq.s32.totalorder %s41, 0
      %p102 = por %p100, %p101
      %p103 = scmp.ne.s32.totalorder %s89, %s90
      %p104 = scmp.eq.s32.totalorder %s42, 1
      %p105 = por %p103, %p104
      %p107 = scmp.ne.s32.totalorder %s90, %s106
      %p108 = scmp.eq.s32.totalorder %s42, 0
      %p109 = por %p107, %p108
      %s110 = ssub.s32 %s43, %s55
      %p111 = scmp.eq.s32.totalorder %s110, 0
      %s113 = sadd.s32 %s112, 1
      %s114 = scalar_select %p111, %s112, %s113
      %p117 = pneg %p111
      %p118 = scmp.eq.s32.totalorder %s36, 1
      %p119 = por %p117, %p118
      %p120 = scmp.ne.s32.totalorder %s112, %s115
      %p121 = scmp.eq.s32.totalorder %s36, 0
      %p122 = por %p120, %p121
      %p123 = scmp.ne.s32.totalorder %s112, %s115
      %p124 = scmp.eq.s32.totalorder %s41, 1
      %p125 = por %p123, %p124
      %p126 = scmp.ne.s32.totalorder %s115, %s116
      %p127 = scmp.eq.s32.totalorder %s41, 0
      %p128 = por %p126, %p127
      %p129 = scmp.ne.s32.totalorder %s115, %s116
      %p130 = scmp.eq.s32.totalorder %s42, 1
      %p131 = por %p129, %p130
      %p133 = scmp.ne.s32.totalorder %s116, %s132
      %p134 = scmp.eq.s32.totalorder %s42, 0
      %p135 = por %p133, %p134
      %s136 = ssub.s32 %s43, %s55
      %s137 = ssub.s32 %s44, %s51
      %s138 = sor.u32 %s136, %s137
      %p139 = scmp.eq.s32.totalorder %s138, 0
      %s141 = sadd.s32 %s140, 1
      %s142 = scalar_select %p139, %s140, %s141
      %p145 = pneg %p139
      %p146 = scmp.eq.s32.totalorder %s36, 1
      %p147 = por %p145, %p146
      %p148 = scmp.ne.s32.totalorder %s140, %s143
      %p149 = scmp.eq.s32.totalorder %s36, 0
      %p150 = por %p148, %p149
      %p151 = scmp.ne.s32.totalorder %s140, %s143
      %p152 = scmp.eq.s32.totalorder %s41, 1
      %p153 = por %p151, %p152
      %p154 = scmp.ne.s32.totalorder %s143, %s144
      %p155 = scmp.eq.s32.totalorder %s41, 0
      %p156 = por %p154, %p155
      %p157 = scmp.ne.s32.totalorder %s143, %s144
      %p158 = scmp.eq.s32.totalorder %s42, 1
      %p159 = por %p157, %p158
      %p161 = scmp.ne.s32.totalorder %s144, %s160
      %p162 = scmp.eq.s32.totalorder %s42, 0
      %p163 = por %p161, %p162
      %s165 = sadd.s32 %s164, 1
      %p168 = scmp.eq.s32.totalorder %s36, 1
      %p169 = scmp.ne.s32.totalorder %s164, %s166
      %p170 = scmp.eq.s32.totalorder %s36, 0
      %p171 = por %p169, %p170
      %p172 = scmp.ne.s32.totalorder %s164, %s166
      %p173 = scmp.eq.s32.totalorder %s41, 1
      %p174 = por %p172, %p173
      %p175 = scmp.ne.s32.totalorder %s166, %s167
      %p176 = scmp.eq.s32.totalorder %s41, 0
      %p177 = por %p175, %p176
      %p178 = scmp.ne.s32.totalorder %s166, %s167
      %p179 = scmp.eq.s32.totalorder %s42, 1
      %p180 = por %p178, %p179
      %p182 = scmp.ne.s32.totalorder %s167, %s181
      %p183 = scmp.eq.s32.totalorder %s42, 0
      %p184 = por %p182, %p183
      %s186 = sadd.s32 %s185, 1
      %p189 = scmp.eq.s32.totalorder %s36, 1
      %p190 = scmp.ne.s32.totalorder %s185, %s187
      %p191 = scmp.eq.s32.totalorder %s36, 0
      %p192 = por %p190, %p191
      %p193 = scmp.ne.s32.totalorder %s185, %s187
      %p194 = scmp.eq.s32.totalorder %s41, 1
      %p195 = por %p193, %p194
      %p196 = scmp.ne.s32.totalorder %s187, %s188
      %p197 = scmp.eq.s32.totalorder %s41, 0
      %p198 = por %p196, %p197
      %p199 = scmp.ne.s32.totalorder %s187, %s188
      %p200 = scmp.eq.s32.totalorder %s42, 1
      %p201 = por %p199, %p200
      %p203 = scmp.ne.s32.totalorder %s188, %s202
      %p204 = scmp.eq.s32.totalorder %s42, 0
      %p205 = por %p203, %p204
      %s207 = sadd.s32 %s206, 1
      %p210 = scmp.eq.s32.totalorder %s36, 1
      %p211 = scmp.ne.s32.totalorder %s206, %s208
      %p212 = scmp.eq.s32.totalorder %s36, 0
      %p213 = por %p211, %p212
      %p214 = scmp.ne.s32.totalorder %s206, %s208
      %p215 = scmp.eq.s32.totalorder %s41, 1
      %p216 = por %p214, %p215
      %p217 = scmp.ne.s32.totalorder %s208, %s209
      %p218 = scmp.eq.s32.totalorder %s41, 0
      %p219 = por %p217, %p218
      %p220 = scmp.ne.s32.totalorder %s208, %s209
      %p221 = scmp.eq.s32.totalorder %s42, 1
      %p222 = por %p220, %p221
      %p224 = scmp.ne.s32.totalorder %s209, %s223
      %p225 = scmp.eq.s32.totalorder %s42, 0
      %p226 = por %p224, %p225
      %s228 = sadd.s32 %s227, 1
      %p231 = scmp.eq.s32.totalorder %s36, 1
      %p232 = scmp.ne.s32.totalorder %s227, %s229
      %p233 = scmp.eq.s32.totalorder %s36, 0
      %p234 = por %p232, %p233
      %p235 = scmp.ne.s32.totalorder %s227, %s229
      %p236 = scmp.eq.s32.totalorder %s41, 1
      %p237 = por %p235, %p236
      %p238 = scmp.ne.s32.totalorder %s229, %s230
      %p239 = scmp.eq.s32.totalorder %s41, 0
      %p240 = por %p238, %p239
      %p241 = scmp.ne.s32.totalorder %s229, %s230
      %p242 = scmp.eq.s32.totalorder %s42, 1
      %p243 = por %p241, %p242
      %p245 = scmp.ne.s32.totalorder %s230, %s244
      %p246 = scmp.eq.s32.totalorder %s42, 0
      %p247 = por %p245, %p246
      %s249 = sadd.s32 %s248, 1
      %p252 = scmp.eq.s32.totalorder %s36, 1
      %p253 = scmp.ne.s32.totalorder %s248, %s250
      %p254 = scmp.eq.s32.totalorder %s36, 0
      %p255 = por %p253, %p254
      %p256 = scmp.ne.s32.totalorder %s248, %s250
      %p257 = scmp.eq.s32.totalorder %s41, 1
      %p258 = por %p256, %p257
      %p259 = scmp.ne.s32.totalorder %s250, %s251
      %p260 = scmp.eq.s32.totalorder %s41, 0
      %p261 = por %p259, %p260
      %p262 = scmp.ne.s32.totalorder %s250, %s251
      %p263 = scmp.eq.s32.totalorder %s42, 1
      %p264 = por %p262, %p263
      %p266 = scmp.ne.s32.totalorder %s251, %s265
      %p267 = scmp.eq.s32.totalorder %s42, 0
      %p268 = por %p266, %p267
      %s270 = sadd.s32 %s269, 1
      %p273 = scmp.eq.s32.totalorder %s36, 1
      %p274 = scmp.ne.s32.totalorder %s269, %s271
      %p275 = scmp.eq.s32.totalorder %s36, 0
      %p276 = por %p274, %p275
      %p277 = scmp.ne.s32.totalorder %s269, %s271
      %p278 = scmp.eq.s32.totalorder %s41, 1
      %p279 = por %p277, %p278
      %p280 = scmp.ne.s32.totalorder %s271, %s272
      %p281 = scmp.eq.s32.totalorder %s41, 0
      %p282 = por %p280, %p281
      %p283 = scmp.ne.s32.totalorder %s271, %s272
      %p284 = scmp.eq.s32.totalorder %s42, 1
      %p285 = por %p283, %p284
      %p287 = scmp.ne.s32.totalorder %s272, %s286
      %p288 = scmp.eq.s32.totalorder %s42, 0
      %p289 = por %p287, %p288
      %s291 = sadd.s32 %s290, 1
      %p294 = scmp.eq.s32.totalorder %s36, 1
      %p295 = scmp.ne.s32.totalorder %s290, %s292
      %p296 = scmp.eq.s32.totalorder %s36, 0
      %p297 = por %p295, %p296
      %p298 = scmp.ne.s32.totalorder %s290, %s292
      %p299 = scmp.eq.s32.totalorder %s41, 1
      %p300 = por %p298, %p299
      %p301 = scmp.ne.s32.totalorder %s292, %s293
      %p302 = scmp.eq.s32.totalorder %s41, 0
      %p303 = por %p301, %p302
      %p304 = scmp.ne.s32.totalorder %s292, %s293
      %p305 = scmp.eq.s32.totalorder %s42, 1
      %p306 = por %p304, %p305
      %p308 = scmp.ne.s32.totalorder %s293, %s307
      %p309 = scmp.eq.s32.totalorder %s42, 0
      %p310 = por %p308, %p309
      %s312 = sadd.s32 %s311, 1
      %p315 = scmp.eq.s32.totalorder %s36, 1
      %p316 = scmp.ne.s32.totalorder %s311, %s313
      %p317 = scmp.eq.s32.totalorder %s36, 0
      %p318 = por %p316, %p317
      %p319 = scmp.ne.s32.totalorder %s311, %s313
      %p320 = scmp.eq.s32.totalorder %s41, 1
      %p321 = por %p319, %p320
      %p322 = scmp.ne.s32.totalorder %s313, %s314
      %p323 = scmp.eq.s32.totalorder %s41, 0
      %p324 = por %p322, %p323
      %p325 = scmp.ne.s32.totalorder %s313, %s314
      %p326 = scmp.eq.s32.totalorder %s42, 1
      %p327 = por %p325, %p326
      %p329 = scmp.ne.s32.totalorder %s314, %s328
      %p330 = scmp.eq.s32.totalorder %s42, 0
      %p331 = por %p329, %p330
      %s332 = ssub.s32 %s43, %s55
      %s333 = ssub.s32 %s44, %s51
      %s334 = sor.u32 %s332, %s333
      %p335 = scmp.eq.s32.totalorder %s334, 0
      %s337 = sadd.s32 %s336, 1
      %s338 = scalar_select %p335, %s336, %s337
      %p341 = pneg %p335
      %p342 = scmp.eq.s32.totalorder %s36, 1
      %p343 = por %p341, %p342
      %p344 = scmp.ne.s32.totalorder %s336, %s339
      %p345 = scmp.eq.s32.totalorder %s36, 0
      %p346 = por %p344, %p345
      %p347 = scmp.ne.s32.totalorder %s336, %s339
      %p348 = scmp.eq.s32.totalorder %s41, 1
      %p349 = por %p347, %p348
      %p350 = scmp.ne.s32.totalorder %s339, %s340
      %p351 = scmp.eq.s32.totalorder %s41, 0
      %p352 = por %p350, %p351
      %p353 = scmp.ne.s32.totalorder %s339, %s340
      %p354 = scmp.eq.s32.totalorder %s42, 1
      %p355 = por %p353, %p354
      %p357 = scmp.ne.s32.totalorder %s340, %s356
      %p358 = scmp.eq.s32.totalorder %s42, 0
      %p359 = por %p357, %p358
      %s360 = ssub.s32 %s43, %s55
      %s361 = ssub.s32 %s44, %s51
      %s362 = sor.u32 %s360, %s361
      %p363 = scmp.eq.s32.totalorder %s362, 0
      %s365 = sadd.s32 %s364, 1
      %s366 = scalar_select %p363, %s364, %s365
      %p369 = pneg %p363
      %p370 = scmp.eq.s32.totalorder %s36, 1
      %p371 = por %p369, %p370
      %p372 = scmp.ne.s32.totalorder %s364, %s367
      %p373 = scmp.eq.s32.totalorder %s36, 0
      %p374 = por %p372, %p373
      %p375 = scmp.ne.s32.totalorder %s364, %s367
      %p376 = scmp.eq.s32.totalorder %s41, 1
      %p377 = por %p375, %p376
      %p378 = scmp.ne.s32.totalorder %s367, %s368
      %p379 = scmp.eq.s32.totalorder %s41, 0
      %p380 = por %p378, %p379
      %p381 = scmp.ne.s32.totalorder %s367, %s368
      %p382 = scmp.eq.s32.totalorder %s42, 1
      %p383 = por %p381, %p382
      %p385 = scmp.ne.s32.totalorder %s368, %s384
      %p386 = scmp.eq.s32.totalorder %s42, 0
      %p387 = por %p385, %p386
      %p388 = scmp.le.s32.totalorder 1, %s36
      %p389 = scmp.lt.s32.totalorder %s36, 3
      %p390 = pnand %p388, %p389
      %p391 = pneg %p390
      // Predicated region
      $region9: #{tpu_custom_call.1} parent=5 // pred_check
        _
      $region10: #{tpu_custom_call.1} parent=5 // pred_check_branch
        %393 = sbr.rel (%p390) target = $region12
      $region11: #{tpu_custom_call.1} parent=5 // pred_region
        %s394 = ssub.s32 %s36, 1
        // Predicated region
        $region13: #{tpu_custom_call.1} parent=11 // pred_check
          %p395 = pneg %p177
        $region14: #{tpu_custom_call.1} parent=11 // pred_check_branch
          %397 = sbr.rel (%p395) target = $region16
        $region15: #{tpu_custom_call.1} parent=11 // pred_region
          %s399 = ssub.s32 512, 512
          %400 = vsyncadd [#allocation9], %s399
          %s401 = sshll.u32 [#allocation10], 4
          %s402 = int_to_ptr.vmem [resolvable:$true] %s401
          %407 = dma.hbm_to_vmem [thread:$0]  %s4, 512, %s402, [#allocation9], 128, 128, 8
        $region16: #{tpu_custom_call.1} parent=11 // pred_fallthru
          _
        // Predicated region
        $region17: #{tpu_custom_call.1} parent=11 // pred_check
          %p408 = pneg %p198
        $region18: #{tpu_custom_call.1} parent=11 // pred_check_branch
          %410 = sbr.rel (%p408) target = $region20
        $region19: #{tpu_custom_call.1} parent=11 // pred_region
          _
        $region20: #{tpu_custom_call.1} parent=11 // pred_fallthru
          _
        // Predicated region
        $region21: #{tpu_custom_call.1} parent=11 // pred_check
          %p411 = pneg %p219
        $region22: #{tpu_custom_call.1} parent=11 // pred_check_branch
          %413 = sbr.rel (%p411) target = $region24
        $region23: #{tpu_custom_call.1} parent=11 // pred_region
          %s415 = ssub.s32 512, 512
          %416 = vsyncadd [#allocation12], %s415
          %s417 = sshll.u32 [#allocation11], 4
          %s418 = int_to_ptr.vmem [resolvable:$true] %s417
          %423 = dma.hbm_to_vmem [thread:$0]  %s6, 512, %s418, [#allocation12], 128, 128, 8
        $region24: #{tpu_custom_call.1} parent=11 // pred_fallthru
          _
        // Predicated region
        $region25: #{tpu_custom_call.1} parent=11 // pred_check
          %p424 = pneg %p240
        $region26: #{tpu_custom_call.1} parent=11 // pred_check_branch
          %426 = sbr.rel (%p424) target = $region28
        $region27: #{tpu_custom_call.1} parent=11 // pred_region
          _
        $region28: #{tpu_custom_call.1} parent=11 // pred_fallthru
          _
        // Predicated region
        $region29: #{tpu_custom_call.1} parent=11 // pred_check
          %p427 = pneg %p261
        $region30: #{tpu_custom_call.1} parent=11 // pred_check_branch
          %429 = sbr.rel (%p427) target = $region32
        $region31: #{tpu_custom_call.1} parent=11 // pred_region
          %s431 = ssub.s32 512, 512
          %432 = vsyncadd [#allocation12], %s431
          %s433 = sshll.u32 [#allocation13], 4
          %s434 = int_to_ptr.vmem [resolvable:$true] %s433
          %439 = dma.hbm_to_vmem [thread:$0]  %s8, 512, %s434, [#allocation12], 128, 128, 8
        $region32: #{tpu_custom_call.1} parent=11 // pred_fallthru
          _
        // Predicated region
        $region33: #{tpu_custom_call.1} parent=11 // pred_check
          %p440 = pneg %p282
        $region34: #{tpu_custom_call.1} parent=11 // pred_check_branch
          %442 = sbr.rel (%p440) target = $region36
        $region35: #{tpu_custom_call.1} parent=11 // pred_region
          _
        $region36: #{tpu_custom_call.1} parent=11 // pred_fallthru
          _
        // Predicated region
        $region37: #{tpu_custom_call.1} parent=11 // pred_check
          %p443 = pneg %p303
        $region38: #{tpu_custom_call.1} parent=11 // pred_check_branch
          %445 = sbr.rel (%p443) target = $region40
        $region39: #{tpu_custom_call.1} parent=11 // pred_region
          _
        $region40: #{tpu_custom_call.1} parent=11 // pred_fallthru
          _
        // Predicated region
        $region41: #{tpu_custom_call.1} parent=11 // pred_check
          %p446 = pneg %p324
        $region42: #{tpu_custom_call.1} parent=11 // pred_check_branch
          %448 = sbr.rel (%p446) target = $region44
        $region43: #{tpu_custom_call.1} parent=11 // pred_region
          _
        $region44: #{tpu_custom_call.1} parent=11 // pred_fallthru
          _
      $region12: #{tpu_custom_call.1} parent=5 // pred_fallthru
        _
      %p449 = scmp.lt.s32.totalorder %s36, 2
      // Predicated region
      $region45: #{tpu_custom_call.1} parent=5 // pred_check
        %p450 = pneg %p449
      $region46: #{tpu_custom_call.1} parent=5 // pred_check_branch
        %452 = sbr.rel (%p450) target = $region48
      $region47: #{tpu_custom_call.1} parent=5 // pred_region
        // Predicated region
        $region49: #{tpu_custom_call.1} parent=47 // pred_check
          %p453 = pneg %p70
        $region50: #{tpu_custom_call.1} parent=47 // pred_check_branch
          %455 = sbr.rel (%p453) target = $region52
        $region51: #{tpu_custom_call.1} parent=47 // pred_region
          %s456 = sand.u32 %s60, 1
          %s457 = scalar_lea.sflag [#allocation3], %s456
          %s458 = sand.u32 %s60, 1
          %s459 = smul.addr %s458, 8
          %s460 = scalar_lea.vmem [#allocation2], %s459
          %s462 = ssub.s32 128, 128
          %463 = vsyncadd %s457, %s462
          %s464 = sadd.s32 %s44, %s43
          %s465 = smul.addr %s464, 128
          %s466 = scalar_lea.hbm %s0, %s465
          %s468 = sshll.u32 %s460, 4
          %s469 = int_to_ptr.vmem [resolvable:$true] %s468
          %471 = dma.hbm_to_vmem [thread:$0]  %s466, 128, %s469, %s457
        $region52: #{tpu_custom_call.1} parent=47 // pred_fallthru
          _
        // Predicated region
        $region53: #{tpu_custom_call.1} parent=47 // pred_check
          %p472 = pneg %p96
        $region54: #{tpu_custom_call.1} parent=47 // pred_check_branch
          %474 = sbr.rel (%p472) target = $region56
        $region55: #{tpu_custom_call.1} parent=47 // pred_region
          %s475 = sand.u32 %s36, 1
          %s476 = scalar_lea.sflag [#allocation6], %s475
          %s477 = sand.u32 %s86, 1
          %s478 = smul.addr %s477, 8
          %s479 = scalar_lea.vmem [#allocation5], %s478
          %s481 = ssub.s32 128, 128
          %482 = vsyncadd %s476, %s481
          %s483 = smul.addr %s43, 128
          %s484 = scalar_lea.hbm %s1, %s483
          %s486 = sshll.u32 %s479, 4
          %s487 = int_to_ptr.vmem [resolvable:$true] %s486
          %489 = dma.hbm_to_vmem [thread:$0]  %s484, 128, %s487, %s476
        $region56: #{tpu_custom_call.1} parent=47 // pred_fallthru
          _
        // Predicated region
        $region57: #{tpu_custom_call.1} parent=47 // pred_check
          %p490 = pneg %p122
        $region58: #{tpu_custom_call.1} parent=47 // pred_check_branch
          %492 = sbr.rel (%p490) target = $region60
        $region59: #{tpu_custom_call.1} parent=47 // pred_region
          %s493 = sand.u32 %s36, 1
          %s494 = scalar_lea.sflag [#allocation6], %s493
          %s495 = sand.u32 %s112, 1
          %s496 = smul.addr %s495, 8
          %s497 = scalar_lea.vmem [#allocation7], %s496
          %s499 = ssub.s32 128, 128
          %500 = vsyncadd %s494, %s499
          %s501 = smul.addr %s43, 128
          %s502 = scalar_lea.hbm %s2, %s501
          %s504 = sshll.u32 %s497, 4
          %s505 = int_to_ptr.vmem [resolvable:$true] %s504
          %507 = dma.hbm_to_vmem [thread:$0]  %s502, 128, %s505, %s494
        $region60: #{tpu_custom_call.1} parent=47 // pred_fallthru
          _
        // Predicated region
        $region61: #{tpu_custom_call.1} parent=47 // pred_check
          %p508 = pneg %p150
        $region62: #{tpu_custom_call.1} parent=47 // pred_check_branch
          %510 = sbr.rel (%p508) target = $region64
        $region63: #{tpu_custom_call.1} parent=47 // pred_region
          %s511 = sand.u32 %s36, 1
          %s512 = scalar_lea.sflag [#allocation9], %s511
          %s513 = sand.u32 %s140, 1
          %s514 = smul.addr %s513, 8
          %s515 = scalar_lea.vmem [#allocation8], %s514
          %s517 = ssub.s32 128, 128
          %518 = vsyncadd %s512, %s517
          %s519 = sadd.s32 %s44, %s43
          %s520 = smul.addr %s519, 128
          %s521 = scalar_lea.hbm %s3, %s520
          %s523 = sshll.u32 %s515, 4
          %s524 = int_to_ptr.vmem [resolvable:$true] %s523
          %526 = dma.hbm_to_vmem [thread:$0]  %s521, 128, %s524, %s512
        $region64: #{tpu_custom_call.1} parent=47 // pred_fallthru
          _
      $region48: #{tpu_custom_call.1} parent=5 // pred_fallthru
        _
      %p527 = scmp.le.s32.totalorder 1, %s36
      %p528 = scmp.lt.s32.totalorder %s36, 3
      %p529 = pnand %p527, %p528
      %p530 = pneg %p529
      // Predicated region
      $region65: #{tpu_custom_call.1} parent=5 // pred_check
        _
      $region66: #{tpu_custom_call.1} parent=5 // pred_check_branch
        %532 = sbr.rel (%p529) target = $region68
      $region67: #{tpu_custom_call.1} parent=5 // pred_region
        %s533 = ssub.s32 %s36, 1
        %s534 = sand.u32 %s63, 1
        %s535 = scalar_lea.sflag [#allocation3], %s534
        %s536 = sand.u32 %s63, 1
        %s537 = smul.addr %s536, 8
        %s538 = scalar_lea.vmem [#allocation2], %s537
        // Predicated region
        $region69: #{tpu_custom_call.1} parent=67 // pred_check
          %p539 = pneg %p76
        $region70: #{tpu_custom_call.1} parent=67 // pred_check_branch
          %541 = sbr.rel (%p539) target = $region72
        $region71: #{tpu_custom_call.1} parent=67 // pred_region
          %542 = dma.done %s535, 128
        $region72: #{tpu_custom_call.1} parent=67 // pred_fallthru
          _
        %s543 = sand.u32 %s41, 1
        %s544 = scalar_lea.sflag [#allocation6], %s543
        %s545 = sand.u32 %s89, 1
        %s546 = smul.addr %s545, 8
        %s547 = scalar_lea.vmem [#allocation5], %s546
        // Predicated region
        $region73: #{tpu_custom_call.1} parent=67 // pred_check
          %p548 = pneg %p102
        $region74: #{tpu_custom_call.1} parent=67 // pred_check_branch
          %550 = sbr.rel (%p548) target = $region76
        $region75: #{tpu_custom_call.1} parent=67 // pred_region
          %551 = dma.done %s544, 128
        $region76: #{tpu_custom_call.1} parent=67 // pred_fallthru
          _
        %s552 = sand.u32 %s41, 1
        %s553 = scalar_lea.sflag [#allocation6], %s552
        %s554 = sand.u32 %s115, 1
        %s555 = smul.addr %s554, 8
        %s556 = scalar_lea.vmem [#allocation7], %s555
        // Predicated region
        $region77: #{tpu_custom_call.1} parent=67 // pred_check
          %p557 = pneg %p128
        $region78: #{tpu_custom_call.1} parent=67 // pred_check_branch
          %559 = sbr.rel (%p557) target = $region80
        $region79: #{tpu_custom_call.1} parent=67 // pred_region
          %560 = dma.done %s553, 128
        $region80: #{tpu_custom_call.1} parent=67 // pred_fallthru
          _
        %s561 = sand.u32 %s41, 1
        %s562 = scalar_lea.sflag [#allocation9], %s561
        %s563 = sand.u32 %s143, 1
        %s564 = smul.addr %s563, 8
        %s565 = scalar_lea.vmem [#allocation8], %s564
        // Predicated region
        $region81: #{tpu_custom_call.1} parent=67 // pred_check
          %p566 = pneg %p156
        $region82: #{tpu_custom_call.1} parent=67 // pred_check_branch
          %568 = sbr.rel (%p566) target = $region84
        $region83: #{tpu_custom_call.1} parent=67 // pred_region
          %569 = dma.done %s562, 128
        $region84: #{tpu_custom_call.1} parent=67 // pred_fallthru
          _
        // Predicated region
        $region85: #{tpu_custom_call.1} parent=67 // pred_check
          %p570 = pneg %p177
        $region86: #{tpu_custom_call.1} parent=67 // pred_check_branch
          %572 = sbr.rel (%p570) target = $region88
        $region87: #{tpu_custom_call.1} parent=67 // pred_region
          %573 = dma.done [#allocation9], 512
        $region88: #{tpu_custom_call.1} parent=67 // pred_fallthru
          _
        // Predicated region
        $region89: #{tpu_custom_call.1} parent=67 // pred_check
          %p574 = pneg %p219
        $region90: #{tpu_custom_call.1} parent=67 // pred_check_branch
          %576 = sbr.rel (%p574) target = $region92
        $region91: #{tpu_custom_call.1} parent=67 // pred_region
          %577 = dma.done [#allocation12], 512
        $region92: #{tpu_custom_call.1} parent=67 // pred_fallthru
          _
        // Predicated region
        $region93: #{tpu_custom_call.1} parent=67 // pred_check
          %p578 = pneg %p261
        $region94: #{tpu_custom_call.1} parent=67 // pred_check_branch
          %580 = sbr.rel (%p578) target = $region96
        $region95: #{tpu_custom_call.1} parent=67 // pred_region
          %581 = dma.done [#allocation12], 512
        $region96: #{tpu_custom_call.1} parent=67 // pred_fallthru
          _
        %s582 = sand.u32 %s63, 1
        %s583 = scalar_lea.sflag [#allocation3], %s582
        %s584 = sand.u32 %s63, 1
        %s585 = smul.addr %s584, 8
        %s586 = scalar_lea.vmem [#allocation2], %s585
        %p587 = pneg %p76
        %p588 = pneg %p73
        %s589 = sand.u32 %s41, 1
        %s590 = scalar_lea.sflag [#allocation6], %s589
        %s591 = sand.u32 %s89, 1
        %s592 = smul.addr %s591, 8
        %s593 = scalar_lea.vmem [#allocation5], %s592
        %p594 = pneg %p102
        %p595 = pneg %p99
        %s596 = sand.u32 %s41, 1
        %s597 = scalar_lea.sflag [#allocation6], %s596
        %s598 = sand.u32 %s115, 1
        %s599 = smul.addr %s598, 8
        %s600 = scalar_lea.vmem [#allocation7], %s599
        %p601 = pneg %p128
        %p602 = pneg %p125
        %s603 = sand.u32 %s41, 1
        %s604 = scalar_lea.sflag [#allocation9], %s603
        %s605 = sand.u32 %s143, 1
        %s606 = smul.addr %s605, 8
        %s607 = scalar_lea.vmem [#allocation8], %s606
        %p608 = pneg %p156
        %p609 = pneg %p153
        %p610 = pneg %p177
        %p611 = pneg %p174
        %p612 = pneg %p198
        %p613 = pneg %p195
        %p614 = pneg %p219
        %p615 = pneg %p216
        %p616 = pneg %p240
        %p617 = pneg %p237
        %p618 = pneg %p261
        %p619 = pneg %p258
        %p620 = pneg %p282
        %p621 = pneg %p279
        %p622 = pneg %p303
        %p623 = pneg %p300
        %p624 = pneg %p324
        %p625 = pneg %p321
        %p626 = pneg %p352
        %p627 = pneg %p349
        %s628 = sand.u32 %s339, 1
        %s629 = scalar_lea.sflag [#allocation4], %s628
        %s630 = sand.u32 %s339, 1
        %s631 = smul.addr %s630, 8
        %s632 = scalar_lea.vmem [#allocation14], %s631
        %p633 = pneg %p380
        %p634 = pneg %p377
        %s635 = sand.u32 %s367, 1
        %s636 = scalar_lea.sflag [#allocation16], %s635
        %s637 = sand.u32 %s367, 1
        %s638 = smul.addr %s637, 32
        %s639 = scalar_lea.vmem [#allocation15], %s638
        %v640 = vld [vmem:[%s538] sm:$0xff]
        %v641 = vld [vmem:[%s547] sm:$0xff]
        %v642 = vld [vmem:[%s556] sm:$0xff]
        %v643 = vld [vmem:[#allocation10] sm:$0xff]
        %v644 = vld [vmem:[#allocation10 + $0x8] sm:$0xff]
        %v645 = vld [vmem:[#allocation10 + $0x10] sm:$0xff]
        %v646 = vld [vmem:[#allocation10 + $0x18] sm:$0xff]
        %v647 = vld [vmem:[%s5] sm:$0x1]
        %v649 = vlaneseq
        %v650 = vshrl.u32 %v649, 7
        %v651 = vsub.s32 0, %v650
        %v652 = vrot.slane %v647, %v651
        %vm654 = vcmask 261120
        %v656 = vsel %vm654, %v640, 0
        %658 = vmatprep.subr.mxu0 0.0
        %659 = vmatpush1.msra.mxu0 0.0
        %660 = vmatprep.subr.mxu0 0.0
        %661 = vmatpush1.msra.mxu0 0.0
        %662 = vmatprep.subr.mxu0 0.0
        %663 = vmatpush1.msra.mxu0 0.0
        %664 = vmatprep.subr.mxu0 0.0
        %665 = vmatpush1.msra.mxu0 0.0
        %666 = vmatprep.subr.mxu0 0.0
        %667 = vmatpush1.msra.mxu0 0.0
        %668 = vmatprep.subr.mxu0 0.0
        %669 = vmatpush1.msra.mxu0 0.0
        %670 = vmatprep.subr.mxu0 0.0
        %671 = vmatpush1.msra.mxu0 0.0
        %672 = vmatprep.subr.mxu0 0.0
        %673 = vmatpush1.msra.mxu0 0.0
        %674 = vmatprep.subr.mxu0 0.0
        %675 = vmatpush1.msra.mxu0 0.0
        %676 = vmatprep.subr.mxu0 0.0
        %677 = vmatpush1.msra.mxu0 0.0
        %678 = vmatprep.subr.mxu0 0.0
        %679 = vmatpush1.msra.mxu0 0.0
        %680 = vmatprep.subr.mxu0 0.0
        %681 = vmatpush1.msra.mxu0 0.0
        %682 = vmatprep.subr.mxu0 0.0
        %683 = vmatpush1.msra.mxu0 %v646
        %684 = vmatprep.subr.mxu0 0.0
        %685 = vmatpush1.msra.mxu0 %v645
        %686 = vmatprep.subr.mxu0 0.0
        %687 = vmatpush1.msra.mxu0 %v644
        %688 = vmatprep.subr.mxu0 0.0
        %689 = vmatpush1.msra.mxu0 %v643
        %690 = vmatprep.subr.mxu0 0.0
        %691 = vmatpush2.msra.mxu0 0.0
        %692 = vmatprep.subr.mxu0 0.0
        %693 = vmatpush2.msra.mxu0 0.0
        %694 = vmatprep.subr.mxu0 0.0
        %695 = vmatpush2.msra.mxu0 0.0
        %696 = vmatprep.subr.mxu0 0.0
        %697 = vmatpush2.msra.mxu0 0.0
        %698 = vmatprep.subr.mxu0 0.0
        %699 = vmatpush2.msra.mxu0 0.0
        %700 = vmatprep.subr.mxu0 0.0
        %701 = vmatpush2.msra.mxu0 0.0
        %702 = vmatprep.subr.mxu0 0.0
        %703 = vmatpush2.msra.mxu0 0.0
        %704 = vmatprep.subr.mxu0 0.0
        %705 = vmatpush2.msra.mxu0 0.0
        %706 = vmatprep.subr.mxu0 0.0
        %707 = vmatpush2.msra.mxu0 0.0
        %708 = vmatprep.subr.mxu0 0.0
        %709 = vmatpush2.msra.mxu0 0.0
        %710 = vmatprep.subr.mxu0 0.0
        %711 = vmatpush2.msra.mxu0 0.0
        %712 = vmatprep.subr.mxu0 0.0
        %713 = vmatpush2.msra.mxu0 0.0
        %714 = vmatprep.subr.mxu0 0.0
        %715 = vmatpush2.msra.mxu0 0.0
        %716 = vmatprep.subr.mxu0 0.0
        %717 = vmatpush2.msra.mxu0 0.0
        %718 = vmatprep.subr.mxu0 0.0
        %719 = vmatpush2.msra.mxu0 0.0
        %720 = vmatprep.subr.mxu0 0.0
        %721 = vmatpush2.msra.mxu0 0.0
        %722 = vmatprep.mubr.f32.mxu0 0.0
        %723 = vmatmul.mubr.f32.gmra.mxu0 %v656
        %v724 = vpop.f32.mrf.mxu0
        %v725 = vadd.f32 %v652, %v724
        %v726 = vpop.f32.mrf.mxu0
        %727 = vdwg.mxu0
        %v728 = vld [vmem:[#allocation11] sm:$0xff]
        %v729 = vld [vmem:[#allocation11 + $0x8] sm:$0xff]
        %v730 = vld [vmem:[#allocation11 + $0x10] sm:$0xff]
        %v731 = vld [vmem:[#allocation11 + $0x18] sm:$0xff]
        %v732 = vld [vmem:[%s7] sm:$0x1]
        %v734 = vlaneseq
        %v735 = vshrl.u32 %v734, 7
        %v736 = vsub.s32 0, %v735
        %v737 = vrot.slane %v732, %v736
        %v740 = vsel %vm654, %v641, 0
        %742 = vmatprep.subr.mxu0 0.0
        %743 = vmatpush1.msra.mxu0 0.0
        %744 = vmatprep.subr.mxu0 0.0
        %745 = vmatpush1.msra.mxu0 0.0
        %746 = vmatprep.subr.mxu0 0.0
        %747 = vmatpush1.msra.mxu0 0.0
        %748 = vmatprep.subr.mxu0 0.0
        %749 = vmatpush1.msra.mxu0 0.0
        %750 = vmatprep.subr.mxu0 0.0
        %751 = vmatpush1.msra.mxu0 0.0
        %752 = vmatprep.subr.mxu0 0.0
        %753 = vmatpush1.msra.mxu0 0.0
        %754 = vmatprep.subr.mxu0 0.0
        %755 = vmatpush1.msra.mxu0 0.0
        %756 = vmatprep.subr.mxu0 0.0
        %757 = vmatpush1.msra.mxu0 0.0
        %758 = vmatprep.subr.mxu0 0.0
        %759 = vmatpush1.msra.mxu0 0.0
        %760 = vmatprep.subr.mxu0 0.0
        %761 = vmatpush1.msra.mxu0 0.0
        %762 = vmatprep.subr.mxu0 0.0
        %763 = vmatpush1.msra.mxu0 0.0
        %764 = vmatprep.subr.mxu0 0.0
        %765 = vmatpush1.msra.mxu0 0.0
        %766 = vmatprep.subr.mxu0 0.0
        %767 = vmatpush1.msra.mxu0 %v731
        %768 = vmatprep.subr.mxu0 0.0
        %769 = vmatpush1.msra.mxu0 %v730
        %770 = vmatprep.subr.mxu0 0.0
        %771 = vmatpush1.msra.mxu0 %v729
        %772 = vmatprep.subr.mxu0 0.0
        %773 = vmatpush1.msra.mxu0 %v728
        %774 = vmatprep.subr.mxu0 0.0
        %775 = vmatpush2.msra.mxu0 0.0
        %776 = vmatprep.subr.mxu0 0.0
        %777 = vmatpush2.msra.mxu0 0.0
        %778 = vmatprep.subr.mxu0 0.0
        %779 = vmatpush2.msra.mxu0 0.0
        %780 = vmatprep.subr.mxu0 0.0
        %781 = vmatpush2.msra.mxu0 0.0
        %782 = vmatprep.subr.mxu0 0.0
        %783 = vmatpush2.msra.mxu0 0.0
        %784 = vmatprep.subr.mxu0 0.0
        %785 = vmatpush2.msra.mxu0 0.0
        %786 = vmatprep.subr.mxu0 0.0
        %787 = vmatpush2.msra.mxu0 0.0
        %788 = vmatprep.subr.mxu0 0.0
        %789 = vmatpush2.msra.mxu0 0.0
        %790 = vmatprep.subr.mxu0 0.0
        %791 = vmatpush2.msra.mxu0 0.0
        %792 = vmatprep.subr.mxu0 0.0
        %793 = vmatpush2.msra.mxu0 0.0
        %794 = vmatprep.subr.mxu0 0.0
        %795 = vmatpush2.msra.mxu0 0.0
        %796 = vmatprep.subr.mxu0 0.0
        %797 = vmatpush2.msra.mxu0 0.0
        %798 = vmatprep.subr.mxu0 0.0
        %799 = vmatpush2.msra.mxu0 0.0
        %800 = vmatprep.subr.mxu0 0.0
        %801 = vmatpush2.msra.mxu0 0.0
        %802 = vmatprep.subr.mxu0 0.0
        %803 = vmatpush2.msra.mxu0 0.0
        %804 = vmatprep.subr.mxu0 0.0
        %805 = vmatpush2.msra.mxu0 0.0
        %806 = vmatprep.mubr.f32.mxu0 0.0
        %807 = vmatmul.mubr.f32.gmra.mxu0 %v740
        %v808 = vpop.f32.mrf.mxu0
        %v809 = vadd.f32 %v737, %v808
        %v810 = vpop.f32.mrf.mxu0
        %811 = vdwg.mxu0
        %v812 = vld [vmem:[#allocation13] sm:$0xff]
        %v813 = vld [vmem:[#allocation13 + $0x8] sm:$0xff]
        %v814 = vld [vmem:[#allocation13 + $0x10] sm:$0xff]
        %v815 = vld [vmem:[#allocation13 + $0x18] sm:$0xff]
        %v816 = vld [vmem:[%s9] sm:$0x1]
        %v818 = vlaneseq
        %v819 = vshrl.u32 %v818, 7
        %v820 = vsub.s32 0, %v819
        %v821 = vrot.slane %v816, %v820
        %v824 = vsel %vm654, %v642, 0
        %826 = vmatprep.subr.mxu0 0.0
        %827 = vmatpush1.msra.mxu0 0.0
        %828 = vmatprep.subr.mxu0 0.0
        %829 = vmatpush1.msra.mxu0 0.0
        %830 = vmatprep.subr.mxu0 0.0
        %831 = vmatpush1.msra.mxu0 0.0
        %832 = vmatprep.subr.mxu0 0.0
        %833 = vmatpush1.msra.mxu0 0.0
        %834 = vmatprep.subr.mxu0 0.0
        %835 = vmatpush1.msra.mxu0 0.0
        %836 = vmatprep.subr.mxu0 0.0
        %837 = vmatpush1.msra.mxu0 0.0
        %838 = vmatprep.subr.mxu0 0.0
        %839 = vmatpush1.msra.mxu0 0.0
        %840 = vmatprep.subr.mxu0 0.0
        %841 = vmatpush1.msra.mxu0 0.0
        %842 = vmatprep.subr.mxu0 0.0
        %843 = vmatpush1.msra.mxu0 0.0
        %844 = vmatprep.subr.mxu0 0.0
        %845 = vmatpush1.msra.mxu0 0.0
        %846 = vmatprep.subr.mxu0 0.0
        %847 = vmatpush1.msra.mxu0 0.0
        %848 = vmatprep.subr.mxu0 0.0
        %849 = vmatpush1.msra.mxu0 0.0
        %850 = vmatprep.subr.mxu0 0.0
        %851 = vmatpush1.msra.mxu0 %v815
        %852 = vmatprep.subr.mxu0 0.0
        %853 = vmatpush1.msra.mxu0 %v814
        %854 = vmatprep.subr.mxu0 0.0
        %855 = vmatpush1.msra.mxu0 %v813
        %856 = vmatprep.subr.mxu0 0.0
        %857 = vmatpush1.msra.mxu0 %v812
        %858 = vmatprep.subr.mxu0 0.0
        %859 = vmatpush2.msra.mxu0 0.0
        %860 = vmatprep.subr.mxu0 0.0
        %861 = vmatpush2.msra.mxu0 0.0
        %862 = vmatprep.subr.mxu0 0.0
        %863 = vmatpush2.msra.mxu0 0.0
        %864 = vmatprep.subr.mxu0 0.0
        %865 = vmatpush2.msra.mxu0 0.0
        %866 = vmatprep.subr.mxu0 0.0
        %867 = vmatpush2.msra.mxu0 0.0
        %868 = vmatprep.subr.mxu0 0.0
        %869 = vmatpush2.msra.mxu0 0.0
        %870 = vmatprep.subr.mxu0 0.0
        %871 = vmatpush2.msra.mxu0 0.0
        %872 = vmatprep.subr.mxu0 0.0
        %873 = vmatpush2.msra.mxu0 0.0
        %874 = vmatprep.subr.mxu0 0.0
        %875 = vmatpush2.msra.mxu0 0.0
        %876 = vmatprep.subr.mxu0 0.0
        %877 = vmatpush2.msra.mxu0 0.0
        %878 = vmatprep.subr.mxu0 0.0
        %879 = vmatpush2.msra.mxu0 0.0
        %880 = vmatprep.subr.mxu0 0.0
        %881 = vmatpush2.msra.mxu0 0.0
        %882 = vmatprep.subr.mxu0 0.0
        %883 = vmatpush2.msra.mxu0 0.0
        %884 = vmatprep.subr.mxu0 0.0
        %885 = vmatpush2.msra.mxu0 0.0
        %886 = vmatprep.subr.mxu0 0.0
        %887 = vmatpush2.msra.mxu0 0.0
        %888 = vmatprep.subr.mxu0 0.0
        %889 = vmatpush2.msra.mxu0 0.0
        %890 = vmatprep.mubr.f32.mxu0 0.0
        %891 = vmatmul.mubr.f32.gmra.mxu0 %v824
        %v892 = vpop.f32.mrf.mxu0
        %v893 = vadd.f32 %v821, %v892
        %v894 = vpop.f32.mrf.mxu0
        %895 = vdwg.mxu0
        %897 = vrot.lane.b32.xlu0 %v725, 120
        %v898 = vpop.permute.xlu0 %897
        %899 = vrot.lane.b32.xlu0 %v725, 112
        %v900 = vpop.permute.xlu0 %899
        %901 = vrot.lane.b32.xlu0 %v725, 104
        %v902 = vpop.permute.xlu0 %901
        %904 = vrot.lane.b32.xlu0 %v809, 120
        %v905 = vpop.permute.xlu0 %904
        %906 = vrot.lane.b32.xlu0 %v809, 112
        %v907 = vpop.permute.xlu0 %906
        %908 = vrot.lane.b32.xlu0 %v809, 104
        %v909 = vpop.permute.xlu0 %908
        %911 = vrot.lane.b32.xlu0 %v893, 120
        %v912 = vpop.permute.xlu0 %911
        %914 = vrot.lane.b32.xlu0 %v893, 112
        %v915 = vpop.permute.xlu0 %914
        %917 = vrot.lane.b32.xlu0 %v893, 104
        %v918 = vpop.permute.xlu0 %917
        %vm920 = vcmask 64512
        %v921 = vsel %vm920, %v725, 0
        %v923 = vsel %vm920, %v809, 0
        %925 = vmatprep.subr.mxu0 0.0
        %926 = vmatpush1.xpose.msra.mxu0 0.0
        %927 = vmatprep.subr.mxu0 0.0
        %928 = vmatpush1.xpose.msra.mxu0 0.0
        %929 = vmatprep.subr.mxu0 0.0
        %930 = vmatpush1.xpose.msra.mxu0 0.0
        %931 = vmatprep.subr.mxu0 0.0
        %932 = vmatpush1.xpose.msra.mxu0 0.0
        %933 = vmatprep.subr.mxu0 0.0
        %934 = vmatpush1.xpose.msra.mxu0 0.0
        %935 = vmatprep.subr.mxu0 0.0
        %936 = vmatpush1.xpose.msra.mxu0 0.0
        %937 = vmatprep.subr.mxu0 0.0
        %938 = vmatpush1.xpose.msra.mxu0 0.0
        %939 = vmatprep.subr.mxu0 0.0
        %940 = vmatpush1.xpose.msra.mxu0 0.0
        %941 = vmatprep.subr.mxu0 0.0
        %942 = vmatpush1.xpose.msra.mxu0 0.0
        %943 = vmatprep.subr.mxu0 0.0
        %944 = vmatpush1.xpose.msra.mxu0 0.0
        %945 = vmatprep.subr.mxu0 0.0
        %946 = vmatpush1.xpose.msra.mxu0 0.0
        %947 = vmatprep.subr.mxu0 0.0
        %948 = vmatpush1.xpose.msra.mxu0 0.0
        %949 = vmatprep.subr.mxu0 0.0
        %950 = vmatpush1.xpose.msra.mxu0 0.0
        %951 = vmatprep.subr.mxu0 0.0
        %952 = vmatpush1.xpose.msra.mxu0 0.0
        %953 = vmatprep.subr.mxu0 0.0
        %954 = vmatpush1.xpose.msra.mxu0 0.0
        %955 = vmatprep.subr.mxu0 0.0
        %956 = vmatpush1.xpose.msra.mxu0 %v923
        %957 = vmatprep.subr.mxu0 0.0
        %958 = vmatpush2.xpose.msra.mxu0 0.0
        %959 = vmatprep.subr.mxu0 0.0
        %960 = vmatpush2.xpose.msra.mxu0 0.0
        %961 = vmatprep.subr.mxu0 0.0
        %962 = vmatpush2.xpose.msra.mxu0 0.0
        %963 = vmatprep.subr.mxu0 0.0
        %964 = vmatpush2.xpose.msra.mxu0 0.0
        %965 = vmatprep.subr.mxu0 0.0
        %966 = vmatpush2.xpose.msra.mxu0 0.0
        %967 = vmatprep.subr.mxu0 0.0
        %968 = vmatpush2.xpose.msra.mxu0 0.0
        %969 = vmatprep.subr.mxu0 0.0
        %970 = vmatpush2.xpose.msra.mxu0 0.0
        %971 = vmatprep.subr.mxu0 0.0
        %972 = vmatpush2.xpose.msra.mxu0 0.0
        %973 = vmatprep.subr.mxu0 0.0
        %974 = vmatpush2.xpose.msra.mxu0 0.0
        %975 = vmatprep.subr.mxu0 0.0
        %976 = vmatpush2.xpose.msra.mxu0 0.0
        %977 = vmatprep.subr.mxu0 0.0
        %978 = vmatpush2.xpose.msra.mxu0 0.0
        %979 = vmatprep.subr.mxu0 0.0
        %980 = vmatpush2.xpose.msra.mxu0 0.0
        %981 = vmatprep.subr.mxu0 0.0
        %982 = vmatpush2.xpose.msra.mxu0 0.0
        %983 = vmatprep.subr.mxu0 0.0
        %984 = vmatpush2.xpose.msra.mxu0 0.0
        %985 = vmatprep.subr.mxu0 0.0
        %986 = vmatpush2.xpose.msra.mxu0 0.0
        %987 = vmatprep.subr.mxu0 0.0
        %988 = vmatpush2.xpose.msra.mxu0 0.0
        %989 = vmatprep.mubr.f32.mxu0 0.0
        %990 = vmatmul.mubr.f32.gmra.mxu0 %v921
        %v991 = vpop.f32.mrf.mxu0
        %v992 = vadd.f32 0.0, %v991
        %v993 = vpop.f32.mrf.mxu0
        %994 = vdwg.mxu0
        %v995 = vsel %vm920, %v898, 0
        %v997 = vsel %vm920, %v905, 0
        %999 = vmatprep.subr.mxu0 0.0
        %1000 = vmatpush1.xpose.msra.mxu0 0.0
        %1001 = vmatprep.subr.mxu0 0.0
        %1002 = vmatpush1.xpose.msra.mxu0 0.0
        %1003 = vmatprep.subr.mxu0 0.0
        %1004 = vmatpush1.xpose.msra.mxu0 0.0
        %1005 = vmatprep.subr.mxu0 0.0
        %1006 = vmatpush1.xpose.msra.mxu0 0.0
        %1007 = vmatprep.subr.mxu0 0.0
        %1008 = vmatpush1.xpose.msra.mxu0 0.0
        %1009 = vmatprep.subr.mxu0 0.0
        %1010 = vmatpush1.xpose.msra.mxu0 0.0
        %1011 = vmatprep.subr.mxu0 0.0
        %1012 = vmatpush1.xpose.msra.mxu0 0.0
        %1013 = vmatprep.subr.mxu0 0.0
        %1014 = vmatpush1.xpose.msra.mxu0 0.0
        %1015 = vmatprep.subr.mxu0 0.0
        %1016 = vmatpush1.xpose.msra.mxu0 0.0
        %1017 = vmatprep.subr.mxu0 0.0
        %1018 = vmatpush1.xpose.msra.mxu0 0.0
        %1019 = vmatprep.subr.mxu0 0.0
        %1020 = vmatpush1.xpose.msra.mxu0 0.0
        %1021 = vmatprep.subr.mxu0 0.0
        %1022 = vmatpush1.xpose.msra.mxu0 0.0
        %1023 = vmatprep.subr.mxu0 0.0
        %1024 = vmatpush1.xpose.msra.mxu0 0.0
        %1025 = vmatprep.subr.mxu0 0.0
        %1026 = vmatpush1.xpose.msra.mxu0 0.0
        %1027 = vmatprep.subr.mxu0 0.0
        %1028 = vmatpush1.xpose.msra.mxu0 0.0
        %1029 = vmatprep.subr.mxu0 0.0
        %1030 = vmatpush1.xpose.msra.mxu0 %v997
        %1031 = vmatprep.subr.mxu0 0.0
        %1032 = vmatpush2.xpose.msra.mxu0 0.0
        %1033 = vmatprep.subr.mxu0 0.0
        %1034 = vmatpush2.xpose.msra.mxu0 0.0
        %1035 = vmatprep.subr.mxu0 0.0
        %1036 = vmatpush2.xpose.msra.mxu0 0.0
        %1037 = vmatprep.subr.mxu0 0.0
        %1038 = vmatpush2.xpose.msra.mxu0 0.0
        %1039 = vmatprep.subr.mxu0 0.0
        %1040 = vmatpush2.xpose.msra.mxu0 0.0
        %1041 = vmatprep.subr.mxu0 0.0
        %1042 = vmatpush2.xpose.msra.mxu0 0.0
        %1043 = vmatprep.subr.mxu0 0.0
        %1044 = vmatpush2.xpose.msra.mxu0 0.0
        %1045 = vmatprep.subr.mxu0 0.0
        %1046 = vmatpush2.xpose.msra.mxu0 0.0
        %1047 = vmatprep.subr.mxu0 0.0
        %1048 = vmatpush2.xpose.msra.mxu0 0.0
        %1049 = vmatprep.subr.mxu0 0.0
        %1050 = vmatpush2.xpose.msra.mxu0 0.0
        %1051 = vmatprep.subr.mxu0 0.0
        %1052 = vmatpush2.xpose.msra.mxu0 0.0
        %1053 = vmatprep.subr.mxu0 0.0
        %1054 = vmatpush2.xpose.msra.mxu0 0.0
        %1055 = vmatprep.subr.mxu0 0.0
        %1056 = vmatpush2.xpose.msra.mxu0 0.0
        %1057 = vmatprep.subr.mxu0 0.0
        %1058 = vmatpush2.xpose.msra.mxu0 0.0
        %1059 = vmatprep.subr.mxu0 0.0
        %1060 = vmatpush2.xpose.msra.mxu0 0.0
        %1061 = vmatprep.subr.mxu0 0.0
        %1062 = vmatpush2.xpose.msra.mxu0 0.0
        %1063 = vmatprep.mubr.f32.mxu0 0.0
        %1064 = vmatmul.mubr.f32.gmra.mxu0 %v995
        %v1065 = vpop.f32.mrf.mxu0
        %v1066 = vadd.f32 0.0, %v1065
        %v1067 = vpop.f32.mrf.mxu0
        %1068 = vdwg.mxu0
        %v1069 = vsel %vm920, %v900, 0
        %v1071 = vsel %vm920, %v907, 0
        %1073 = vmatprep.subr.mxu0 0.0
        %1074 = vmatpush1.xpose.msra.mxu0 0.0
        %1075 = vmatprep.subr.mxu0 0.0
        %1076 = vmatpush1.xpose.msra.mxu0 0.0
        %1077 = vmatprep.subr.mxu0 0.0
        %1078 = vmatpush1.xpose.msra.mxu0 0.0
        %1079 = vmatprep.subr.mxu0 0.0
        %1080 = vmatpush1.xpose.msra.mxu0 0.0
        %1081 = vmatprep.subr.mxu0 0.0
        %1082 = vmatpush1.xpose.msra.mxu0 0.0
        %1083 = vmatprep.subr.mxu0 0.0
        %1084 = vmatpush1.xpose.msra.mxu0 0.0
        %1085 = vmatprep.subr.mxu0 0.0
        %1086 = vmatpush1.xpose.msra.mxu0 0.0
        %1087 = vmatprep.subr.mxu0 0.0
        %1088 = vmatpush1.xpose.msra.mxu0 0.0
        %1089 = vmatprep.subr.mxu0 0.0
        %1090 = vmatpush1.xpose.msra.mxu0 0.0
        %1091 = vmatprep.subr.mxu0 0.0
        %1092 = vmatpush1.xpose.msra.mxu0 0.0
        %1093 = vmatprep.subr.mxu0 0.0
        %1094 = vmatpush1.xpose.msra.mxu0 0.0
        %1095 = vmatprep.subr.mxu0 0.0
        %1096 = vmatpush1.xpose.msra.mxu0 0.0
        %1097 = vmatprep.subr.mxu0 0.0
        %1098 = vmatpush1.xpose.msra.mxu0 0.0
        %1099 = vmatprep.subr.mxu0 0.0
        %1100 = vmatpush1.xpose.msra.mxu0 0.0
        %1101 = vmatprep.subr.mxu0 0.0
        %1102 = vmatpush1.xpose.msra.mxu0 0.0
        %1103 = vmatprep.subr.mxu0 0.0
        %1104 = vmatpush1.xpose.msra.mxu0 %v1071
        %1105 = vmatprep.subr.mxu0 0.0
        %1106 = vmatpush2.xpose.msra.mxu0 0.0
        %1107 = vmatprep.subr.mxu0 0.0
        %1108 = vmatpush2.xpose.msra.mxu0 0.0
        %1109 = vmatprep.subr.mxu0 0.0
        %1110 = vmatpush2.xpose.msra.mxu0 0.0
        %1111 = vmatprep.subr.mxu0 0.0
        %1112 = vmatpush2.xpose.msra.mxu0 0.0
        %1113 = vmatprep.subr.mxu0 0.0
        %1114 = vmatpush2.xpose.msra.mxu0 0.0
        %1115 = vmatprep.subr.mxu0 0.0
        %1116 = vmatpush2.xpose.msra.mxu0 0.0
        %1117 = vmatprep.subr.mxu0 0.0
        %1118 = vmatpush2.xpose.msra.mxu0 0.0
        %1119 = vmatprep.subr.mxu0 0.0
        %1120 = vmatpush2.xpose.msra.mxu0 0.0
        %1121 = vmatprep.subr.mxu0 0.0
        %1122 = vmatpush2.xpose.msra.mxu0 0.0
        %1123 = vmatprep.subr.mxu0 0.0
        %1124 = vmatpush2.xpose.msra.mxu0 0.0
        %1125 = vmatprep.subr.mxu0 0.0
        %1126 = vmatpush2.xpose.msra.mxu0 0.0
        %1127 = vmatprep.subr.mxu0 0.0
        %1128 = vmatpush2.xpose.msra.mxu0 0.0
        %1129 = vmatprep.subr.mxu0 0.0
        %1130 = vmatpush2.xpose.msra.mxu0 0.0
        %1131 = vmatprep.subr.mxu0 0.0
        %1132 = vmatpush2.xpose.msra.mxu0 0.0
        %1133 = vmatprep.subr.mxu0 0.0
        %1134 = vmatpush2.xpose.msra.mxu0 0.0
        %1135 = vmatprep.subr.mxu0 0.0
        %1136 = vmatpush2.xpose.msra.mxu0 0.0
        %1137 = vmatprep.mubr.f32.mxu0 0.0
        %1138 = vmatmul.mubr.f32.gmra.mxu0 %v1069
        %v1139 = vpop.f32.mrf.mxu0
        %v1140 = vadd.f32 0.0, %v1139
        %v1141 = vpop.f32.mrf.mxu0
        %1142 = vdwg.mxu0
        %v1143 = vsel %vm920, %v902, 0
        %v1145 = vsel %vm920, %v909, 0
        %1147 = vmatprep.subr.mxu0 0.0
        %1148 = vmatpush1.xpose.msra.mxu0 0.0
        %1149 = vmatprep.subr.mxu0 0.0
        %1150 = vmatpush1.xpose.msra.mxu0 0.0
        %1151 = vmatprep.subr.mxu0 0.0
        %1152 = vmatpush1.xpose.msra.mxu0 0.0
        %1153 = vmatprep.subr.mxu0 0.0
        %1154 = vmatpush1.xpose.msra.mxu0 0.0
        %1155 = vmatprep.subr.mxu0 0.0
        %1156 = vmatpush1.xpose.msra.mxu0 0.0
        %1157 = vmatprep.subr.mxu0 0.0
        %1158 = vmatpush1.xpose.msra.mxu0 0.0
        %1159 = vmatprep.subr.mxu0 0.0
        %1160 = vmatpush1.xpose.msra.mxu0 0.0
        %1161 = vmatprep.subr.mxu0 0.0
        %1162 = vmatpush1.xpose.msra.mxu0 0.0
        %1163 = vmatprep.subr.mxu0 0.0
        %1164 = vmatpush1.xpose.msra.mxu0 0.0
        %1165 = vmatprep.subr.mxu0 0.0
        %1166 = vmatpush1.xpose.msra.mxu0 0.0
        %1167 = vmatprep.subr.mxu0 0.0
        %1168 = vmatpush1.xpose.msra.mxu0 0.0
        %1169 = vmatprep.subr.mxu0 0.0
        %1170 = vmatpush1.xpose.msra.mxu0 0.0
        %1171 = vmatprep.subr.mxu0 0.0
        %1172 = vmatpush1.xpose.msra.mxu0 0.0
        %1173 = vmatprep.subr.mxu0 0.0
        %1174 = vmatpush1.xpose.msra.mxu0 0.0
        %1175 = vmatprep.subr.mxu0 0.0
        %1176 = vmatpush1.xpose.msra.mxu0 0.0
        %1177 = vmatprep.subr.mxu0 0.0
        %1178 = vmatpush1.xpose.msra.mxu0 %v1145
        %1179 = vmatprep.subr.mxu0 0.0
        %1180 = vmatpush2.xpose.msra.mxu0 0.0
        %1181 = vmatprep.subr.mxu0 0.0
        %1182 = vmatpush2.xpose.msra.mxu0 0.0
        %1183 = vmatprep.subr.mxu0 0.0
        %1184 = vmatpush2.xpose.msra.mxu0 0.0
        %1185 = vmatprep.subr.mxu0 0.0
        %1186 = vmatpush2.xpose.msra.mxu0 0.0
        %1187 = vmatprep.subr.mxu0 0.0
        %1188 = vmatpush2.xpose.msra.mxu0 0.0
        %1189 = vmatprep.subr.mxu0 0.0
        %1190 = vmatpush2.xpose.msra.mxu0 0.0
        %1191 = vmatprep.subr.mxu0 0.0
        %1192 = vmatpush2.xpose.msra.mxu0 0.0
        %1193 = vmatprep.subr.mxu0 0.0
        %1194 = vmatpush2.xpose.msra.mxu0 0.0
        %1195 = vmatprep.subr.mxu0 0.0
        %1196 = vmatpush2.xpose.msra.mxu0 0.0
        %1197 = vmatprep.subr.mxu0 0.0
        %1198 = vmatpush2.xpose.msra.mxu0 0.0
        %1199 = vmatprep.subr.mxu0 0.0
        %1200 = vmatpush2.xpose.msra.mxu0 0.0
        %1201 = vmatprep.subr.mxu0 0.0
        %1202 = vmatpush2.xpose.msra.mxu0 0.0
        %1203 = vmatprep.subr.mxu0 0.0
        %1204 = vmatpush2.xpose.msra.mxu0 0.0
        %1205 = vmatprep.subr.mxu0 0.0
        %1206 = vmatpush2.xpose.msra.mxu0 0.0
        %1207 = vmatprep.subr.mxu0 0.0
        %1208 = vmatpush2.xpose.msra.mxu0 0.0
        %1209 = vmatprep.subr.mxu0 0.0
        %1210 = vmatpush2.xpose.msra.mxu0 0.0
        %1211 = vmatprep.mubr.f32.mxu0 0.0
        %1212 = vmatmul.mubr.f32.gmra.mxu0 %v1143
        %v1213 = vpop.f32.mrf.mxu0
        %v1214 = vadd.f32 0.0, %v1213
        %v1215 = vpop.f32.mrf.mxu0
        %1216 = vdwg.mxu0
        %v1217 = vmul.f32 %v992, 0.35355338
        %v1218 = vmul.f32 %v1066, 0.35355338
        %v1219 = vmul.f32 %v1140, 0.35355338
        %v1220 = vmul.f32 %v1214, 0.35355338
        %v1221 = vsel %vm920, %v1217, -inf
        %1222 = vmax.xlane.f32.xlu0 %v1221
        %v1223 = vpop.xlane.xlu0 %1222
        %v1224 = vsel %vm920, %v1218, -inf
        %1225 = vmax.xlane.f32.xlu0 %v1224
        %v1226 = vpop.xlane.xlu0 %1225
        %v1227 = vsel %vm920, %v1219, -inf
        %1228 = vmax.xlane.f32.xlu0 %v1227
        %v1229 = vpop.xlane.xlu0 %1228
        %v1230 = vsel %vm920, %v1220, -inf
        %1231 = vmax.xlane.f32.xlu0 %v1230
        %v1232 = vpop.xlane.xlu0 %1231
        %v1233 = vsub.f32 %v1217, %v1223
        %v1234 = vsub.f32 %v1218, %v1226
        %v1235 = vsub.f32 %v1219, %v1229
        %v1236 = vsub.f32 %v1220, %v1232
        %v1237 = vmul.f32 %v1233, 1.442695
        %v1238 = vpow.pop %v1237
        %v1239 = vmul.f32 %v1234, 1.442695
        %v1240 = vpow.pop %v1239
        %v1241 = vmul.f32 %v1235, 1.442695
        %v1242 = vpow.pop %v1241
        %v1243 = vmul.f32 %v1236, 1.442695
        %v1244 = vpow.pop %v1243
        %v1245 = vsel %vm920, %v1238, 0.0
        %1246 = vadd.xlane.f32.xlu0 %v1245
        %v1247 = vpop.xlane.xlu0 %1246
        %v1248 = vsel %vm920, %v1240, 0.0
        %1249 = vadd.xlane.f32.xlu0 %v1248
        %v1250 = vpop.xlane.xlu0 %1249
        %v1251 = vsel %vm920, %v1242, 0.0
        %1252 = vadd.xlane.f32.xlu0 %v1251
        %v1253 = vpop.xlane.xlu0 %1252
        %v1254 = vsel %vm920, %v1244, 0.0
        %1255 = vadd.xlane.f32.xlu0 %v1254
        %v1256 = vpop.xlane.xlu0 %1255
        %v1257 = vrcp.pop %v1247
        %v1258 = vrcp.pop %v1250
        %v1259 = vrcp.pop %v1253
        %v1260 = vrcp.pop %v1256
        %v1261 = vmul.f32 %v1238, %v1257
        %v1262 = vmul.f32 %v1240, %v1258
        %v1263 = vmul.f32 %v1242, %v1259
        %v1264 = vmul.f32 %v1244, %v1260
        %1265 = vst.msk [vmem:[%s639] sm:$0xff] %vm920, %v1261
        %1266 = vst.msk [vmem:[%s639 + $0x8] sm:$0xff] %vm920, %v1262
        %1267 = vst.msk [vmem:[%s639 + $0x10] sm:$0xff] %vm920, %v1263
        %1268 = vst.msk [vmem:[%s639 + $0x18] sm:$0xff] %vm920, %v1264
        %v1270 = vsel %vm920, %v1261, 0
        %1272 = vmatprep.subr.mxu0 0.0
        %1273 = vmatpush1.msra.mxu0 0.0
        %1274 = vmatprep.subr.mxu0 0.0
        %1275 = vmatpush1.msra.mxu0 0.0
        %1276 = vmatprep.subr.mxu0 0.0
        %1277 = vmatpush1.msra.mxu0 0.0
        %1278 = vmatprep.subr.mxu0 0.0
        %1279 = vmatpush1.msra.mxu0 0.0
        %1280 = vmatprep.subr.mxu0 0.0
        %1281 = vmatpush1.msra.mxu0 0.0
        %1282 = vmatprep.subr.mxu0 0.0
        %1283 = vmatpush1.msra.mxu0 0.0
        %1284 = vmatprep.subr.mxu0 0.0
        %1285 = vmatpush1.msra.mxu0 0.0
        %1286 = vmatprep.subr.mxu0 0.0
        %1287 = vmatpush1.msra.mxu0 0.0
        %1288 = vmatprep.subr.mxu0 0.0
        %1289 = vmatpush1.msra.mxu0 0.0
        %1290 = vmatprep.subr.mxu0 0.0
        %1291 = vmatpush1.msra.mxu0 0.0
        %1292 = vmatprep.subr.mxu0 0.0
        %1293 = vmatpush1.msra.mxu0 0.0
        %1294 = vmatprep.subr.mxu0 0.0
        %1295 = vmatpush1.msra.mxu0 0.0
        %1296 = vmatprep.subr.mxu0 0.0
        %1297 = vmatpush1.msra.mxu0 0.0
        %1298 = vmatprep.subr.mxu0 0.0
        %1299 = vmatpush1.msra.mxu0 0.0
        %1300 = vmatprep.subr.mxu0 0.0
        %1301 = vmatpush1.msra.mxu0 0.0
        %1302 = vmatprep.subr.mxu0 0.0
        %1303 = vmatpush1.msra.mxu0 %v893
        %1304 = vmatprep.subr.mxu0 0.0
        %1305 = vmatpush2.msra.mxu0 0.0
        %1306 = vmatprep.subr.mxu0 0.0
        %1307 = vmatpush2.msra.mxu0 0.0
        %1308 = vmatprep.subr.mxu0 0.0
        %1309 = vmatpush2.msra.mxu0 0.0
        %1310 = vmatprep.subr.mxu0 0.0
        %1311 = vmatpush2.msra.mxu0 0.0
        %1312 = vmatprep.subr.mxu0 0.0
        %1313 = vmatpush2.msra.mxu0 0.0
        %1314 = vmatprep.subr.mxu0 0.0
        %1315 = vmatpush2.msra.mxu0 0.0
        %1316 = vmatprep.subr.mxu0 0.0
        %1317 = vmatpush2.msra.mxu0 0.0
        %1318 = vmatprep.subr.mxu0 0.0
        %1319 = vmatpush2.msra.mxu0 0.0
        %1320 = vmatprep.subr.mxu0 0.0
        %1321 = vmatpush2.msra.mxu0 0.0
        %1322 = vmatprep.subr.mxu0 0.0
        %1323 = vmatpush2.msra.mxu0 0.0
        %1324 = vmatprep.subr.mxu0 0.0
        %1325 = vmatpush2.msra.mxu0 0.0
        %1326 = vmatprep.subr.mxu0 0.0
        %1327 = vmatpush2.msra.mxu0 0.0
        %1328 = vmatprep.subr.mxu0 0.0
        %1329 = vmatpush2.msra.mxu0 0.0
        %1330 = vmatprep.subr.mxu0 0.0
        %1331 = vmatpush2.msra.mxu0 0.0
        %1332 = vmatprep.subr.mxu0 0.0
        %1333 = vmatpush2.msra.mxu0 0.0
        %1334 = vmatprep.subr.mxu0 0.0
        %1335 = vmatpush2.msra.mxu0 0.0
        %1336 = vmatprep.mubr.f32.mxu0 0.0
        %1337 = vmatmul.mubr.f32.gmra.mxu0 %v1270
        %v1338 = vpop.f32.mrf.mxu0
        %v1339 = vadd.f32 0.0, %v1338
        %v1340 = vpop.f32.mrf.mxu0
        %1341 = vdwg.mxu0
        %v1343 = vsel %vm920, %v1262, 0
        %1345 = vmatprep.subr.mxu0 0.0
        %1346 = vmatpush1.msra.mxu0 0.0
        %1347 = vmatprep.subr.mxu0 0.0
        %1348 = vmatpush1.msra.mxu0 0.0
        %1349 = vmatprep.subr.mxu0 0.0
        %1350 = vmatpush1.msra.mxu0 0.0
        %1351 = vmatprep.subr.mxu0 0.0
        %1352 = vmatpush1.msra.mxu0 0.0
        %1353 = vmatprep.subr.mxu0 0.0
        %1354 = vmatpush1.msra.mxu0 0.0
        %1355 = vmatprep.subr.mxu0 0.0
        %1356 = vmatpush1.msra.mxu0 0.0
        %1357 = vmatprep.subr.mxu0 0.0
        %1358 = vmatpush1.msra.mxu0 0.0
        %1359 = vmatprep.subr.mxu0 0.0
        %1360 = vmatpush1.msra.mxu0 0.0
        %1361 = vmatprep.subr.mxu0 0.0
        %1362 = vmatpush1.msra.mxu0 0.0
        %1363 = vmatprep.subr.mxu0 0.0
        %1364 = vmatpush1.msra.mxu0 0.0
        %1365 = vmatprep.subr.mxu0 0.0
        %1366 = vmatpush1.msra.mxu0 0.0
        %1367 = vmatprep.subr.mxu0 0.0
        %1368 = vmatpush1.msra.mxu0 0.0
        %1369 = vmatprep.subr.mxu0 0.0
        %1370 = vmatpush1.msra.mxu0 0.0
        %1371 = vmatprep.subr.mxu0 0.0
        %1372 = vmatpush1.msra.mxu0 0.0
        %1373 = vmatprep.subr.mxu0 0.0
        %1374 = vmatpush1.msra.mxu0 0.0
        %1375 = vmatprep.subr.mxu0 0.0
        %1376 = vmatpush1.msra.mxu0 %v912
        %1377 = vmatprep.subr.mxu0 0.0
        %1378 = vmatpush2.msra.mxu0 0.0
        %1379 = vmatprep.subr.mxu0 0.0
        %1380 = vmatpush2.msra.mxu0 0.0
        %1381 = vmatprep.subr.mxu0 0.0
        %1382 = vmatpush2.msra.mxu0 0.0
        %1383 = vmatprep.subr.mxu0 0.0
        %1384 = vmatpush2.msra.mxu0 0.0
        %1385 = vmatprep.subr.mxu0 0.0
        %1386 = vmatpush2.msra.mxu0 0.0
        %1387 = vmatprep.subr.mxu0 0.0
        %1388 = vmatpush2.msra.mxu0 0.0
        %1389 = vmatprep.subr.mxu0 0.0
        %1390 = vmatpush2.msra.mxu0 0.0
        %1391 = vmatprep.subr.mxu0 0.0
        %1392 = vmatpush2.msra.mxu0 0.0
        %1393 = vmatprep.subr.mxu0 0.0
        %1394 = vmatpush2.msra.mxu0 0.0
        %1395 = vmatprep.subr.mxu0 0.0
        %1396 = vmatpush2.msra.mxu0 0.0
        %1397 = vmatprep.subr.mxu0 0.0
        %1398 = vmatpush2.msra.mxu0 0.0
        %1399 = vmatprep.subr.mxu0 0.0
        %1400 = vmatpush2.msra.mxu0 0.0
        %1401 = vmatprep.subr.mxu0 0.0
        %1402 = vmatpush2.msra.mxu0 0.0
        %1403 = vmatprep.subr.mxu0 0.0
        %1404 = vmatpush2.msra.mxu0 0.0
        %1405 = vmatprep.subr.mxu0 0.0
        %1406 = vmatpush2.msra.mxu0 0.0
        %1407 = vmatprep.subr.mxu0 0.0
        %1408 = vmatpush2.msra.mxu0 0.0
        %1409 = vmatprep.mubr.f32.mxu0 0.0
        %1410 = vmatmul.mubr.f32.gmra.mxu0 %v1343
        %v1411 = vpop.f32.mrf.mxu0
        %v1412 = vadd.f32 0.0, %v1411
        %v1413 = vpop.f32.mrf.mxu0
        %1414 = vdwg.mxu0
        %v1416 = vsel %vm920, %v1263, 0
        %1418 = vmatprep.subr.mxu0 0.0
        %1419 = vmatpush1.msra.mxu0 0.0
        %1420 = vmatprep.subr.mxu0 0.0
        %1421 = vmatpush1.msra.mxu0 0.0
        %1422 = vmatprep.subr.mxu0 0.0
        %1423 = vmatpush1.msra.mxu0 0.0
        %1424 = vmatprep.subr.mxu0 0.0
        %1425 = vmatpush1.msra.mxu0 0.0
        %1426 = vmatprep.subr.mxu0 0.0
        %1427 = vmatpush1.msra.mxu0 0.0
        %1428 = vmatprep.subr.mxu0 0.0
        %1429 = vmatpush1.msra.mxu0 0.0
        %1430 = vmatprep.subr.mxu0 0.0
        %1431 = vmatpush1.msra.mxu0 0.0
        %1432 = vmatprep.subr.mxu0 0.0
        %1433 = vmatpush1.msra.mxu0 0.0
        %1434 = vmatprep.subr.mxu0 0.0
        %1435 = vmatpush1.msra.mxu0 0.0
        %1436 = vmatprep.subr.mxu0 0.0
        %1437 = vmatpush1.msra.mxu0 0.0
        %1438 = vmatprep.subr.mxu0 0.0
        %1439 = vmatpush1.msra.mxu0 0.0
        %1440 = vmatprep.subr.mxu0 0.0
        %1441 = vmatpush1.msra.mxu0 0.0
        %1442 = vmatprep.subr.mxu0 0.0
        %1443 = vmatpush1.msra.mxu0 0.0
        %1444 = vmatprep.subr.mxu0 0.0
        %1445 = vmatpush1.msra.mxu0 0.0
        %1446 = vmatprep.subr.mxu0 0.0
        %1447 = vmatpush1.msra.mxu0 0.0
        %1448 = vmatprep.subr.mxu0 0.0
        %1449 = vmatpush1.msra.mxu0 %v915
        %1450 = vmatprep.subr.mxu0 0.0
        %1451 = vmatpush2.msra.mxu0 0.0
        %1452 = vmatprep.subr.mxu0 0.0
        %1453 = vmatpush2.msra.mxu0 0.0
        %1454 = vmatprep.subr.mxu0 0.0
        %1455 = vmatpush2.msra.mxu0 0.0
        %1456 = vmatprep.subr.mxu0 0.0
        %1457 = vmatpush2.msra.mxu0 0.0
        %1458 = vmatprep.subr.mxu0 0.0
        %1459 = vmatpush2.msra.mxu0 0.0
        %1460 = vmatprep.subr.mxu0 0.0
        %1461 = vmatpush2.msra.mxu0 0.0
        %1462 = vmatprep.subr.mxu0 0.0
        %1463 = vmatpush2.msra.mxu0 0.0
        %1464 = vmatprep.subr.mxu0 0.0
        %1465 = vmatpush2.msra.mxu0 0.0
        %1466 = vmatprep.subr.mxu0 0.0
        %1467 = vmatpush2.msra.mxu0 0.0
        %1468 = vmatprep.subr.mxu0 0.0
        %1469 = vmatpush2.msra.mxu0 0.0
        %1470 = vmatprep.subr.mxu0 0.0
        %1471 = vmatpush2.msra.mxu0 0.0
        %1472 = vmatprep.subr.mxu0 0.0
        %1473 = vmatpush2.msra.mxu0 0.0
        %1474 = vmatprep.subr.mxu0 0.0
        %1475 = vmatpush2.msra.mxu0 0.0
        %1476 = vmatprep.subr.mxu0 0.0
        %1477 = vmatpush2.msra.mxu0 0.0
        %1478 = vmatprep.subr.mxu0 0.0
        %1479 = vmatpush2.msra.mxu0 0.0
        %1480 = vmatprep.subr.mxu0 0.0
        %1481 = vmatpush2.msra.mxu0 0.0
        %1482 = vmatprep.mubr.f32.mxu0 0.0
        %1483 = vmatmul.mubr.f32.gmra.mxu0 %v1416
        %v1484 = vpop.f32.mrf.mxu0
        %v1485 = vadd.f32 0.0, %v1484
        %v1486 = vpop.f32.mrf.mxu0
        %1487 = vdwg.mxu0
        %v1489 = vsel %vm920, %v1264, 0
        %1491 = vmatprep.subr.mxu0 0.0
        %1492 = vmatpush1.msra.mxu0 0.0
        %1493 = vmatprep.subr.mxu0 0.0
        %1494 = vmatpush1.msra.mxu0 0.0
        %1495 = vmatprep.subr.mxu0 0.0
        %1496 = vmatpush1.msra.mxu0 0.0
        %1497 = vmatprep.subr.mxu0 0.0
        %1498 = vmatpush1.msra.mxu0 0.0
        %1499 = vmatprep.subr.mxu0 0.0
        %1500 = vmatpush1.msra.mxu0 0.0
        %1501 = vmatprep.subr.mxu0 0.0
        %1502 = vmatpush1.msra.mxu0 0.0
        %1503 = vmatprep.subr.mxu0 0.0
        %1504 = vmatpush1.msra.mxu0 0.0
        %1505 = vmatprep.subr.mxu0 0.0
        %1506 = vmatpush1.msra.mxu0 0.0
        %1507 = vmatprep.subr.mxu0 0.0
        %1508 = vmatpush1.msra.mxu0 0.0
        %1509 = vmatprep.subr.mxu0 0.0
        %1510 = vmatpush1.msra.mxu0 0.0
        %1511 = vmatprep.subr.mxu0 0.0
        %1512 = vmatpush1.msra.mxu0 0.0
        %1513 = vmatprep.subr.mxu0 0.0
        %1514 = vmatpush1.msra.mxu0 0.0
        %1515 = vmatprep.subr.mxu0 0.0
        %1516 = vmatpush1.msra.mxu0 0.0
        %1517 = vmatprep.subr.mxu0 0.0
        %1518 = vmatpush1.msra.mxu0 0.0
        %1519 = vmatprep.subr.mxu0 0.0
        %1520 = vmatpush1.msra.mxu0 0.0
        %1521 = vmatprep.subr.mxu0 0.0
        %1522 = vmatpush1.msra.mxu0 %v918
        %1523 = vmatprep.subr.mxu0 0.0
        %1524 = vmatpush2.msra.mxu0 0.0
        %1525 = vmatprep.subr.mxu0 0.0
        %1526 = vmatpush2.msra.mxu0 0.0
        %1527 = vmatprep.subr.mxu0 0.0
        %1528 = vmatpush2.msra.mxu0 0.0
        %1529 = vmatprep.subr.mxu0 0.0
        %1530 = vmatpush2.msra.mxu0 0.0
        %1531 = vmatprep.subr.mxu0 0.0
        %1532 = vmatpush2.msra.mxu0 0.0
        %1533 = vmatprep.subr.mxu0 0.0
        %1534 = vmatpush2.msra.mxu0 0.0
        %1535 = vmatprep.subr.mxu0 0.0
        %1536 = vmatpush2.msra.mxu0 0.0
        %1537 = vmatprep.subr.mxu0 0.0
        %1538 = vmatpush2.msra.mxu0 0.0
        %1539 = vmatprep.subr.mxu0 0.0
        %1540 = vmatpush2.msra.mxu0 0.0
        %1541 = vmatprep.subr.mxu0 0.0
        %1542 = vmatpush2.msra.mxu0 0.0
        %1543 = vmatprep.subr.mxu0 0.0
        %1544 = vmatpush2.msra.mxu0 0.0
        %1545 = vmatprep.subr.mxu0 0.0
        %1546 = vmatpush2.msra.mxu0 0.0
        %1547 = vmatprep.subr.mxu0 0.0
        %1548 = vmatpush2.msra.mxu0 0.0
        %1549 = vmatprep.subr.mxu0 0.0
        %1550 = vmatpush2.msra.mxu0 0.0
        %1551 = vmatprep.subr.mxu0 0.0
        %1552 = vmatpush2.msra.mxu0 0.0
        %1553 = vmatprep.subr.mxu0 0.0
        %1554 = vmatpush2.msra.mxu0 0.0
        %1555 = vmatprep.mubr.f32.mxu0 0.0
        %1556 = vmatmul.mubr.f32.gmra.mxu0 %v1489
        %v1557 = vpop.f32.mrf.mxu0
        %v1558 = vadd.f32 0.0, %v1557
        %v1559 = vpop.f32.mrf.mxu0
        %1560 = vdwg.mxu0
        %1562 = vrot.lane.b32.xlu0 %v1412, 8
        %v1563 = vpop.permute.xlu0 %1562
        %1566 = vrot.lane.b32.xlu0 %v1485, 16
        %v1567 = vpop.permute.xlu0 %1566
        %1570 = vrot.lane.b32.xlu0 %v1558, 24
        %v1571 = vpop.permute.xlu0 %1570
        %v1573 = vsel %vm920, %v1339, %v1563
        %vm1574 = vcmask 130048
        %v1575 = vsel %vm1574, %v1573, %v1567
        %vm1576 = vcmask 195584
        %v1577 = vsel %vm1576, %v1575, %v1571
        %v1578 = vld [vmem:[%s565] sm:$0xff]
        %v1579 = vadd.f32 %v1577, %v1578
        %v1580 = vsel %vm654, %v1579, 0.0
        %1581 = vadd.xlane.f32.xlu0 %v1580
        %v1582 = vpop.xlane.xlu0 %1581
        %v1583 = vrcp.pop 32.0
        %v1584 = vmul.f32 %v1582, %v1583
        %v1585 = vsub.f32 %v1579, %v1584
        %v1586 = vmul.f32 %v1585, %v1585
        %v1587 = vsel %vm654, %v1586, 0.0
        %1588 = vadd.xlane.f32.xlu0 %v1587
        %v1589 = vpop.xlane.xlu0 %1588
        %v1590 = vmul.f32 %v1589, %v1583
        %v1591 = vadd.f32 %v1590, 1e-06
        %v1592 = vrsqrt.pop %v1591
        %v1593 = vmul.f32 %v1585, %v1592
        %v1594 = vld [vmem:[%s10] sm:$0x1]
        %v1596 = vlaneseq
        %v1597 = vshrl.u32 %v1596, 7
        %v1598 = vsub.s32 0, %v1597
        %v1599 = vrot.slane %v1594, %v1598
        %v1601 = vmul.f32 %v1593, %v1599
        %v1602 = vld [vmem:[%s11] sm:$0x1]
        %v1604 = vlaneseq
        %v1605 = vshrl.u32 %v1604, 7
        %v1606 = vsub.s32 0, %v1605
        %v1607 = vrot.slane %v1602, %v1606
        %v1609 = vadd.f32 %v1601, %v1607
        %1610 = vst.msk [vmem:[%s632] sm:$0xff] %vm654, %v1609
        %s1611 = sand.u32 %s339, 1
        %s1612 = scalar_lea.sflag [#allocation4], %s1611
        %s1613 = sand.u32 %s339, 1
        %s1614 = smul.addr %s1613, 8
        %s1615 = scalar_lea.vmem [#allocation14], %s1614
        %s1616 = sand.u32 %s367, 1
        %s1617 = scalar_lea.sflag [#allocation16], %s1616
        %s1618 = sand.u32 %s367, 1
        %s1619 = smul.addr %s1618, 32
        %s1620 = scalar_lea.vmem [#allocation15], %s1619
        // Predicated region
        $region97: #{tpu_custom_call.1} parent=67 // pred_check
          %p1621 = pneg %p349
        $region98: #{tpu_custom_call.1} parent=67 // pred_check_branch
          %1623 = sbr.rel (%p1621) target = $region100
        $region99: #{tpu_custom_call.1} parent=67 // pred_region
          %s1625 = ssub.s32 128, 128
          %1626 = vsyncadd %s1612, %s1625
          %s1627 = sadd.s32 %s46, %s45
          %s1628 = smul.addr %s1627, 128
          %s1629 = scalar_lea.hbm %s12, %s1628
          %s1631 = sshll.u32 %s1615, 4
          %s1632 = int_to_ptr.vmem [resolvable:$true] %s1631
          %1634 = dma.vmem_to_hbm [thread:$0]  %s1632, 128, %s1629, %s1612
        $region100: #{tpu_custom_call.1} parent=67 // pred_fallthru
          _
        // Predicated region
        $region101: #{tpu_custom_call.1} parent=67 // pred_check
          %p1635 = pneg %p377
        $region102: #{tpu_custom_call.1} parent=67 // pred_check_branch
          %1637 = sbr.rel (%p1635) target = $region104
        $region103: #{tpu_custom_call.1} parent=67 // pred_region
          %s1639 = ssub.s32 512, 512
          %1640 = vsyncadd %s1617, %s1639
          %s1641 = smul.addr %s45, 4
          %s1642 = sadd.s32 %s46, %s1641
          %s1643 = smul.addr %s1642, 128
          %s1644 = scalar_lea.hbm %s13, %s1643
          %s1645 = sshll.u32 %s1620, 4
          %s1646 = int_to_ptr.vmem [resolvable:$true] %s1645
          %1651 = dma.vmem_to_hbm [thread:$0]  %s1646, 512, %s1644, %s1617, 128, 128, 8
        $region104: #{tpu_custom_call.1} parent=67 // pred_fallthru
          _
      $region68: #{tpu_custom_call.1} parent=5 // pred_fallthru
        _
      %p1652 = scmp.le.s32.totalorder 2, %s36
      // Predicated region
      $region105: #{tpu_custom_call.1} parent=5 // pred_check
        %p1653 = pneg %p1652
      $region106: #{tpu_custom_call.1} parent=5 // pred_check_branch
        %1655 = sbr.rel (%p1653) target = $region108
      $region107: #{tpu_custom_call.1} parent=5 // pred_region
        %s1656 = ssub.s32 %s36, 2
        // Predicated region
        $region109: #{tpu_custom_call.1} parent=107 // pred_check
          %p1657 = pneg %p355
        $region110: #{tpu_custom_call.1} parent=107 // pred_check_branch
          %1659 = sbr.rel (%p1657) target = $region112
        $region111: #{tpu_custom_call.1} parent=107 // pred_region
          %s1660 = sand.u32 %s340, 1
          %s1661 = scalar_lea.sflag [#allocation4], %s1660
          %s1662 = sand.u32 %s340, 1
          %s1663 = smul.addr %s1662, 8
          %s1664 = scalar_lea.vmem [#allocation14], %s1663
          %1665 = dma.done %s1661, 128
        $region112: #{tpu_custom_call.1} parent=107 // pred_fallthru
          _
        // Predicated region
        $region113: #{tpu_custom_call.1} parent=107 // pred_check
          %p1666 = pneg %p383
        $region114: #{tpu_custom_call.1} parent=107 // pred_check_branch
          %1668 = sbr.rel (%p1666) target = $region116
        $region115: #{tpu_custom_call.1} parent=107 // pred_region
          %s1669 = sand.u32 %s368, 1
          %s1670 = scalar_lea.sflag [#allocation16], %s1669
          %s1671 = sand.u32 %s368, 1
          %s1672 = smul.addr %s1671, 32
          %s1673 = scalar_lea.vmem [#allocation15], %s1672
          %1674 = dma.done %s1670, 512
        $region116: #{tpu_custom_call.1} parent=107 // pred_fallthru
          _
      $region108: #{tpu_custom_call.1} parent=5 // pred_fallthru
        _
    $region6: #{tpu_custom_call.1} parent=1 // loop_footer
      %s40 = sadd.s32 1, %s36
    $region7: #{tpu_custom_call.1} parent=1 // loop_footer_branch
      %35 = sbr.rel target = $region3
    $region8: #{tpu_custom_call.1} parent=1 // loop_exit
      _
    %1675 = vsyncpa [#allocation3], 1
    %s1676 = scalar_lea.sflag [#allocation3], 1
    %1677 = vsyncpa %s1676, 1
    %1678 = vsyncpa [#allocation6], 1
    %s1679 = scalar_lea.sflag [#allocation6], 1
    %1680 = vsyncpa %s1679, 1
    %1681 = vsyncpa [#allocation9], 1
    %s1682 = scalar_lea.sflag [#allocation9], 1
    %1683 = vsyncpa %s1682, 1
    %1684 = vsyncpa [#allocation12], 1
    %1685 = vsyncpa [#allocation4], 1
    %s1686 = scalar_lea.sflag [#allocation4], 1
    %1687 = vsyncpa %s1686, 1
    %1688 = vsyncpa [#allocation16], 1
    %s1689 = scalar_lea.sflag [#allocation16], 1
    %1690 = vsyncpa %s1689, 1

</llo_original>
